<compile_context>
chip_gen: v7x
topology: tpu7x:2x2x1
jax: 0.10.0
libtpu: 0.0.40
codegen_flags: <defaults>
</compile_context>

<pallas_src>
import math
import functools

import jax
import jax.numpy as jnp
from jax import lax
from jax.experimental import pallas as pl
from jax.experimental.pallas import tpu as pltpu


# ------------------------------- tiling helpers ------------------------------

def _seq_tile(n, cap=256):
    """Largest tile (multiple of 8, <= cap) dividing n, else n (full block)."""
    for t in (256, 128, 64, 32, 16, 8):
        if t <= cap and n % t == 0:
            return t
    return n


def _vmem_limit(est_bytes):
    """Scoped-VMEM limit: raise above the 16/32 MiB defaults when the estimated
    footprint needs it; cap at 64 MiB (v7x per-TC physical budget)."""
    floor = 32 * 1024 * 1024
    cap = 64 * 1024 * 1024
    return int(min(cap, max(floor, 1.3 * est_bytes)))


# ------------------------------- Pallas kernels ------------------------------

def _mha_addnorm_kernel(xq_ref, xkv_ref, hm_ref, vm_ref,
                        wq_ref, wk_ref, wv_ref, wo_ref, bo_ref,
                        g_ref, beta_ref, o_ref, acc_ref, *, causal):
    """One (batch, q-tile, head) step of fused MHA + output proj + AddNorm.

    Grid: (B, Tq/tq, H); heads are the innermost ("arbitrary") reduction axis
    accumulating the output projection into acc_ref.  AddNorm epilogue runs on
    the last head.
    """
    h = pl.program_id(2)

    @pl.when(h == 0)
    def _():
        acc_ref[...] = jnp.zeros_like(acc_ref)

    xq = xq_ref[0]                              # (tq, dm) f32 (residual)
    xkv = xkv_ref[0]                            # (Tk, dm) f32
    xq_b = xq.astype(jnp.bfloat16)
    xkv_b = xkv.astype(jnp.bfloat16)

    # Per-head projections (bf16 operands, f32 accumulation).  1/d_k is folded
    # into w_q, so no per-score scaling is needed.
    q = jnp.dot(xq_b, wq_ref[0], preferred_element_type=jnp.float32)   # (tq, dk)
    k = jnp.dot(xkv_b, wk_ref[0], preferred_element_type=jnp.float32)  # (Tk, dk)
    v = jnp.dot(xkv_b, wv_ref[0], preferred_element_type=jnp.float32)  # (Tk, dv)

    # scores = q @ k^T (contract dk), f32 accumulator.
    s = lax.dot_general(q.astype(jnp.bfloat16), k.astype(jnp.bfloat16),
                        (((1,), (1,)), ((), ())),
                        preferred_element_type=jnp.float32)            # (tq, Tk)

    # Padding mask built in VMEM from the two 1-D masks: mask[i,j]=hm[i]*vm[j].
    mask = hm_ref[0] * vm_ref[0]                                        # (tq, Tk)
    s = s * mask
    s = jnp.where(s == 0.0, jnp.float32(1e-10), s)   # masked_fill(==0, 1e-10), f32 compare

    if causal:
        tq = xq.shape[0]
        tk = xkv.shape[0]
        row = pl.program_id(1) * tq + lax.broadcasted_iota(jnp.int32, (tq, tk), 0)
        col = lax.broadcasted_iota(jnp.int32, (tq, tk), 1)
        s = jnp.where(col > row, -jnp.inf, s)

    # Softmax (f32), EUP reciprocal for the denominator.
    m = jnp.max(s, axis=-1, keepdims=True)
    e = jnp.exp(s - m)
    p = e * pl.reciprocal(jnp.sum(e, axis=-1, keepdims=True), approx=True)

    ctx = jnp.dot(p.astype(jnp.bfloat16), v.astype(jnp.bfloat16),
                  preferred_element_type=jnp.float32)                   # (tq, dv)

    # Per-head slice of the output projection, accumulated across heads.
    acc_ref[...] += jnp.dot(ctx.astype(jnp.bfloat16), wo_ref[0],
                            preferred_element_type=jnp.float32)         # (tq, dm)

    @pl.when(h == pl.num_programs(2) - 1)
    def _():
        z = xq + acc_ref[...] + bo_ref[...]
        mean = jnp.mean(z, axis=-1, keepdims=True)
        var = jnp.mean(jnp.square(z - mean), axis=-1, keepdims=True)
        o_ref[0] = (z - mean) * lax.rsqrt(var + 1e-6) * g_ref[...] + beta_ref[...]


def _ffn_addnorm_kernel(x_ref, w1_ref, b1_ref, w2_ref, b2_ref,
                        g_ref, beta_ref, o_ref):
    """relu(x@W1+b1)@W2+b2 followed by fused AddNorm, on a row tile."""
    x = x_ref[...]                                                       # (tm, D) f32
    h = jnp.dot(x.astype(jnp.bfloat16), w1_ref[...],
                preferred_element_type=jnp.float32) + b1_ref[...]
    h = jnp.maximum(h, 0.0)
    y = jnp.dot(h.astype(jnp.bfloat16), w2_ref[...],
                preferred_element_type=jnp.float32) + b2_ref[...]
    z = x + y
    mean = jnp.mean(z, axis=-1, keepdims=True)
    var = jnp.mean(jnp.square(z - mean), axis=-1, keepdims=True)
    o_ref[...] = (z - mean) * lax.rsqrt(var + 1e-6) * g_ref[...] + beta_ref[...]


def _linear_kernel(x_ref, w_ref, b_ref, o_ref):
    o_ref[...] = jnp.dot(x_ref[...].astype(jnp.bfloat16), w_ref[...],
                         preferred_element_type=jnp.float32) + b_ref[...]


# ---------------------------------- wrappers ----------------------------------

def mha_addnorm(xq, xkv, hmask_col, vmask_row, p, ln, *, causal):
    B, Tq, dm = xq.shape
    Tk = xkv.shape[1]
    H, _, dk = p["w_q"].shape
    dv = p["w_v"].shape[2]
    tq = _seq_tile(Tq)

    # Rough scoped-VMEM footprint (double-buffered blocks + in-kernel temps).
    dkp, dvp, dmp, tkp = max(dk, 128), max(dv, 128), max(dm, 128), max(Tk, 128)
    est = (2 * 4 * (tq * dmp + Tk * dmp + tq * dmp)             # xq, xkv, out blocks
           + 2 * 2 * (2 * dmp * dkp + dmp * dvp + dvp * dmp)    # bf16 weight blocks
           + 2 * 4 * (3 * dmp + tq * 128 + tkp)                 # bias/ln/mask blocks
           + 4 * tq * dmp                                       # accumulator scratch
           + 4 * (tq * dkp + Tk * dkp + Tk * dvp                # q, k, v temps
                  + 4 * tq * Tk + tq * dvp + 2 * tq * dmp))     # scores/exp/p, ctx

    kernel = functools.partial(_mha_addnorm_kernel, causal=causal)
    return pl.pallas_call(
        kernel,
        out_shape=jax.ShapeDtypeStruct((B, Tq, dm), jnp.float32),
        grid=(B, Tq // tq, H),
        in_specs=[
            pl.BlockSpec((1, tq, dm), lambda b, qi, h: (b, qi, 0)),   # xq (residual)
            pl.BlockSpec((1, Tk, dm), lambda b, qi, h: (b, 0, 0)),    # xkv
            pl.BlockSpec((1, tq, 1), lambda b, qi, h: (b, qi, 0)),    # query-side mask
            pl.BlockSpec((1, 1, Tk), lambda b, qi, h: (b, 0, 0)),     # key-side mask
            pl.BlockSpec((1, dm, dk), lambda b, qi, h: (h, 0, 0)),    # w_q (1/d_k folded)
            pl.BlockSpec((1, dm, dk), lambda b, qi, h: (h, 0, 0)),    # w_k
            pl.BlockSpec((1, dm, dv), lambda b, qi, h: (h, 0, 0)),    # w_v
            pl.BlockSpec((1, dv, dm), lambda b, qi, h: (h, 0, 0)),    # w_o (head-major)
            pl.BlockSpec((1, dm), lambda b, qi, h: (0, 0)),           # b_o
            pl.BlockSpec((1, dm), lambda b, qi, h: (0, 0)),           # gamma
            pl.BlockSpec((1, dm), lambda b, qi, h: (0, 0)),           # beta
        ],
        out_specs=pl.BlockSpec((1, tq, dm), lambda b, qi, h: (b, qi, 0)),
        scratch_shapes=[pltpu.VMEM((tq, dm), jnp.float32)],
        compiler_params=pltpu.CompilerParams(
            dimension_semantics=("parallel", "parallel", "arbitrary"),
            vmem_limit_bytes=_vmem_limit(est)),
    )(xq, xkv, hmask_col, vmask_row,
      p["w_q"], p["w_k"], p["w_v"], p["w_o"], p["b_o"],
      ln["gamma"], ln["beta"])


def ffn_addnorm(x, p, ln):
    B, T, D = x.shape
    F = p["w1"].shape[1]
    M = B * T
    tm = _seq_tile(M, cap=256)          # 256 cap keeps v5e's scoped VMEM happy
    x2 = x.reshape(M, D)

    dp, fp = max(D, 128), max(F, 128)
    est = (2 * 4 * (2 * tm * dp)                  # x, out blocks
           + 2 * 2 * (2 * dp * fp)                # bf16 W1/W2 (double-buffered)
           + 2 * 4 * (fp + 3 * dp)                # biases / gamma / beta
           + 4 * (3 * tm * fp + 3 * tm * dp))     # in-kernel temps

    y = pl.pallas_call(
        _ffn_addnorm_kernel,
        out_shape=jax.ShapeDtypeStruct((M, D), jnp.float32),
        grid=(M // tm,),
        in_specs=[
            pl.BlockSpec((tm, D), lambda i: (i, 0)),
            pl.BlockSpec((D, F), lambda i: (0, 0)),
            pl.BlockSpec((1, F), lambda i: (0, 0)),
            pl.BlockSpec((F, D), lambda i: (0, 0)),
            pl.BlockSpec((1, D), lambda i: (0, 0)),
            pl.BlockSpec((1, D), lambda i: (0, 0)),
            pl.BlockSpec((1, D), lambda i: (0, 0)),
        ],
        out_specs=pl.BlockSpec((tm, D), lambda i: (i, 0)),
        compiler_params=pltpu.CompilerParams(
            dimension_semantics=("parallel",),
            vmem_limit_bytes=_vmem_limit(est)),
    )(x2, p["w1"], p["b1"], p["w2"], p["b2"], ln["gamma"], ln["beta"])
    return y.reshape(B, T, D)


def linear_padded(x, w, b):
    """x:(B,T,D) f32, w:(D,Vp) bf16 (Vp multiple of 128), b:(1,Vp) f32."""
    B, T, D = x.shape
    Vp = w.shape[1]
    M = B * T
    tm = _seq_tile(M)
    tn = 256 if Vp % 256 == 0 else 128
    x2 = x.reshape(M, D)

    dp = max(D, 128)
    est = (2 * 4 * (tm * dp + tm * tn) + 2 * 2 * dp * tn + 2 * 4 * tn + 4 * tm * tn)

    y = pl.pallas_call(
        _linear_kernel,
        out_shape=jax.ShapeDtypeStruct((M, Vp), jnp.float32),
        grid=(M // tm, Vp // tn),
        in_specs=[
            pl.BlockSpec((tm, D), lambda i, j: (i, 0)),
            pl.BlockSpec((D, tn), lambda i, j: (0, j)),
            pl.BlockSpec((1, tn), lambda i, j: (0, j)),
        ],
        out_specs=pl.BlockSpec((tm, tn), lambda i, j: (i, j)),
        compiler_params=pltpu.CompilerParams(
            dimension_semantics=("parallel", "parallel"),
            vmem_limit_bytes=_vmem_limit(est)),
    )(x2, w, b)
    return y.reshape(B, T, Vp)


# ------------------------------- parameter init -------------------------------

def init_mha_params(key, heads, dm, dk, dv):
    k1, k2, k3, k4, k5 = jax.random.split(key, 5)
    std_k = 1.0 / math.sqrt(dk)
    std_v = 1.0 / math.sqrt(dv)
    w_q = jax.random.normal(k1, (heads, dm, dk), jnp.float32) * std_k
    w_k = jax.random.normal(k2, (heads, dm, dk), jnp.float32) * std_k
    w_v = jax.random.normal(k3, (heads, dm, dv), jnp.float32) * std_v
    # Fold the 1/d_k score scale into w_q (exact zeros stay zero under scaling).
    w_q = w_q / float(dk)
    # nn.Linear(d_v*heads, dm): store head-major (H, dv, dm) bf16.
    w_o = (jax.random.normal(k4, (heads * dv, dm), jnp.float32)
           * (1.0 / math.sqrt(heads * dv))).reshape(heads, dv, dm)
    b_o = jax.random.normal(k5, (1, dm), jnp.float32) * 0.02
    return dict(
        w_q=w_q.astype(jnp.bfloat16), w_k=w_k.astype(jnp.bfloat16),
        w_v=w_v.astype(jnp.bfloat16), w_o=w_o.astype(jnp.bfloat16),
        b_o=b_o)


def init_ffn_params(key, dm, dff):
    k1, k2, k3, k4 = jax.random.split(key, 4)
    return dict(
        w1=(jax.random.normal(k1, (dm, dff), jnp.float32)
            * (1.0 / math.sqrt(dm))).astype(jnp.bfloat16),
        b1=jax.random.normal(k2, (1, dff), jnp.float32) * 0.02,
        w2=(jax.random.normal(k3, (dff, dm), jnp.float32)
            * (1.0 / math.sqrt(dff))).astype(jnp.bfloat16),
        b2=jax.random.normal(k4, (1, dm), jnp.float32) * 0.02)


def init_addnorm_params(dm):
    return dict(gamma=jnp.ones((1, dm), jnp.float32),
                beta=jnp.zeros((1, dm), jnp.float32))


def make_positional_encoding(max_len, d_model):
    pos = jnp.arange(max_len, dtype=jnp.float32)[:, None]
    freq = jnp.exp(jnp.arange(0, d_model, 2, dtype=jnp.float32)
                   * -(math.log(10000.0) / d_model))
    pe = jnp.zeros((max_len, d_model), jnp.float32)
    pe = pe.at[:, 0::2].set(jnp.sin(pos * freq))
    pe = pe.at[:, 1::2].set(jnp.cos(pos * freq))
    return pe


def init_transformer_params(key, *, src_vocab, tgt_vocab, n, d_model, heads,
                            max_len, d_ff, pad_idx):
    dqkv = d_model // heads
    keys = jax.random.split(key, 3 + 2 * n)

    src_emb = jax.random.normal(keys[0], (src_vocab, d_model), jnp.float32)
    src_emb = src_emb.at[pad_idx].set(0.0)
    tgt_emb = jax.random.normal(keys[1], (tgt_vocab, d_model), jnp.float32)
    tgt_emb = tgt_emb.at[pad_idx].set(0.0)

    encoders = []
    for i in range(n):
        ks = jax.random.split(keys[2 + i], 2)
        encoders.append(dict(
            self_attn=init_mha_params(ks[0], heads, d_model, dqkv, dqkv),
            ffn=init_ffn_params(ks[1], d_model, d_ff),
            ln0=init_addnorm_params(d_model),
            ln1=init_addnorm_params(d_model)))

    decoders = []
    for i in range(n):
        ks = jax.random.split(keys[2 + n + i], 3)
        decoders.append(dict(
            self_attn=init_mha_params(ks[0], heads, d_model, dqkv, dqkv),
            cross_attn=init_mha_params(ks[1], heads, d_model, dqkv, dqkv),
            ffn=init_ffn_params(ks[2], d_model, d_ff),
            ln0=init_addnorm_params(d_model),
            ln1=init_addnorm_params(d_model),
            ln2=init_addnorm_params(d_model)))

    # Final projection, xavier_uniform, padded to a lane-dense column count.
    kf1, _ = jax.random.split(keys[2 + 2 * n], 2)
    bound = math.sqrt(6.0 / (d_model + tgt_vocab))
    final_w = jax.random.uniform(kf1, (d_model, tgt_vocab), jnp.float32, -bound, bound)
    v_pad = ((tgt_vocab + 127) // 128) * 128
    final_w_p = jnp.zeros((d_model, v_pad), jnp.float32).at[:, :tgt_vocab].set(final_w)
    final_b_p = jnp.zeros((1, v_pad), jnp.float32)

    return dict(
        src_emb=src_emb, tgt_emb=tgt_emb,
        pe=make_positional_encoding(max_len, d_model),
        encoders=encoders, decoders=decoders,
        final_w=final_w_p.astype(jnp.bfloat16), final_b=final_b_p,
        d_model=d_model, heads=heads, d_k=dqkv, d_v=dqkv, tgt_vocab=tgt_vocab)


# -------------------------------- forward pass --------------------------------

def encoder_layer(p, x, src_col, src_row):
    x = mha_addnorm(x, x, src_col, src_row, p["self_attn"], p["ln0"], causal=False)
    x = ffn_addnorm(x, p["ffn"], p["ln1"])
    return x


def decoder_layer(p, x, x_enc, src_row, tgt_col, tgt_row):
    x = mha_addnorm(x, x, tgt_col, tgt_row, p["self_attn"], p["ln0"], causal=True)
    x = mha_addnorm(x, x_enc, tgt_col, src_row, p["cross_attn"], p["ln1"], causal=False)
    x = ffn_addnorm(x, p["ffn"], p["ln2"])
    return x


def transformer_forward(params, src_input, tgt_input):
    d_model = params["d_model"]

    src_mask = (src_input != 0).astype(jnp.float32)   # (B, Ts)
    tgt_mask = (tgt_input != 0).astype(jnp.float32)   # (B, Tt)
    # 1-D masks only; the (T,T) product mask[i,j]=hmask[i]*vmask[j] is built
    # inside the attention kernel (no O(B*T^2) HBM traffic).
    src_col = src_mask[:, :, None]
    src_row = src_mask[:, None, :]
    tgt_col = tgt_mask[:, :, None]
    tgt_row = tgt_mask[:, None, :]

    Ts = src_input.shape[1]
    # NOTE: dropout layers are identity (inference-mode semantics).
    x_enc = jnp.take(params["src_emb"], src_input, axis=0) * math.sqrt(d_model)
    x_enc = x_enc + params["pe"][None, :Ts, :]
    for p in params["encoders"]:
        x_enc = encoder_layer(p, x_enc, src_col, src_row)

    Tt = tgt_input.shape[1]
    x_dec = jnp.take(params["tgt_emb"], tgt_input, axis=0) * math.sqrt(d_model)
    x_dec = x_dec + params["pe"][None, :Tt, :]
    for p in params["decoders"]:
        x_dec = decoder_layer(p, x_dec, x_enc, src_row, tgt_col, tgt_row)

    logits = linear_padded(x_dec, params["final_w"], params["final_b"])
    return logits[:, :, :params["tgt_vocab"]]


# ------------------------------ pure-JAX reference -----------------------------

def _ref_layernorm(z, ln):
    mean = jnp.mean(z, axis=-1, keepdims=True)
    var = jnp.mean(jnp.square(z - mean), axis=-1, keepdims=True)
    return (z - mean) * lax.rsqrt(var + 1e-6) * ln["gamma"] + ln["beta"]


def _ref_mha_addnorm(xq, xkv, hmask, vmask, p, ln, causal):
    B, Tq, dm = xq.shape
    Tk = xkv.shape[1]
    H = p["w_q"].shape[0]
    mask = hmask[:, :, None] * vmask[:, None, :]
    xq_b = xq.astype(jnp.bfloat16)
    xkv_b = xkv.astype(jnp.bfloat16)
    acc = jnp.zeros((B, Tq, dm), jnp.float32)
    for h in range(H):
        q = jnp.einsum("btd,dk->btk", xq_b, p["w_q"][h],
                       preferred_element_type=jnp.float32)
        k = jnp.einsum("btd,dk->btk", xkv_b, p["w_k"][h],
                       preferred_element_type=jnp.float32)
        v = jnp.einsum("btd,dk->btk", xkv_b, p["w_v"][h],
                       preferred_element_type=jnp.float32)
        s = jnp.einsum("bqd,bkd->bqk", q.astype(jnp.bfloat16), k.astype(jnp.bfloat16),
                       preferred_element_type=jnp.float32)
        s = s * mask
        s = jnp.where(s == 0.0, 1e-10, s)
        if causal:
            s = s + jnp.triu(jnp.full((Tq, Tk), -jnp.inf, jnp.float32), k=1)
        a = jax.nn.softmax(s, axis=-1)
        ctx = jnp.einsum("bqk,bkd->bqd", a.astype(jnp.bfloat16), v.astype(jnp.bfloat16),
                         preferred_element_type=jnp.float32)
        acc = acc + jnp.einsum("bqd,dm->bqm", ctx.astype(jnp.bfloat16), p["w_o"][h],
                               preferred_element_type=jnp.float32)
    y = acc + p["b_o"]
    return _ref_layernorm(xq + y, ln)


def _ref_ffn_addnorm(x, p, ln):
    h = jnp.einsum("btd,df->btf", x.astype(jnp.bfloat16), p["w1"],
                   preferred_element_type=jnp.float32) + p["b1"]
    h = jnp.maximum(h, 0.0)
    y = jnp.einsum("btf,fd->btd", h.astype(jnp.bfloat16), p["w2"],
                   preferred_element_type=jnp.float32) + p["b2"]
    return _ref_layernorm(x + y, ln)


def transformer_forward_ref(params, src_input, tgt_input):
    d_model = params["d_model"]
    src_mask = (src_input != 0).astype(jnp.float32)
    tgt_mask = (tgt_input != 0).astype(jnp.float32)

    Ts = src_input.shape[1]
    x_enc = jnp.take(params["src_emb"], src_input, axis=0) * math.sqrt(d_model)
    x_enc = x_enc + params["pe"][None, :Ts, :]
    for p in params["encoders"]:
        x_enc = _ref_mha_addnorm(x_enc, x_enc, src_mask, src_mask,
                                 p["self_attn"], p["ln0"], False)
        x_enc = _ref_ffn_addnorm(x_enc, p["ffn"], p["ln1"])

    Tt = tgt_input.shape[1]
    x_dec = jnp.take(params["tgt_emb"], tgt_input, axis=0) * math.sqrt(d_model)
    x_dec = x_dec + params["pe"][None, :Tt, :]
    for p in params["decoders"]:
        x_dec = _ref_mha_addnorm(x_dec, x_dec, tgt_mask, tgt_mask,
                                 p["self_attn"], p["ln0"], True)
        x_dec = _ref_mha_addnorm(x_dec, x_enc, tgt_mask, src_mask,
                                 p["cross_attn"], p["ln1"], False)
        x_dec = _ref_ffn_addnorm(x_dec, p["ffn"], p["ln2"])

    logits = jnp.einsum("btd,dv->btv", x_dec.astype(jnp.bfloat16), params["final_w"],
                        preferred_element_type=jnp.float32) + params["final_b"]
    return logits[:, :, :params["tgt_vocab"]]


# -------------------------------------- main -----------------------------------

if __name__ == "__main__":
    # Small, module-consistent hyperparameters.
    B, T = 2, 8
    src_vocab, tgt_vocab = 11, 13
    n, d_model, heads, d_ff = 2, 32, 4, 64
    max_len, pad_idx = T, 0

    key = jax.random.PRNGKey(0)
    kp, ks, kt = jax.random.split(key, 3)

    params = init_transformer_params(
        kp, src_vocab=src_vocab, tgt_vocab=tgt_vocab, n=n, d_model=d_model,
        heads=heads, max_len=max_len, d_ff=d_ff, pad_idx=pad_idx)

    src_input = jax.random.randint(ks, (B, T), 0, src_vocab, dtype=jnp.int32)
    tgt_input = jax.random.randint(kt, (B, T), 0, tgt_vocab, dtype=jnp.int32)
    # Force a few padding tokens so the padding-mask path is exercised.
    src_input = src_input.at[0, -1].set(0)
    tgt_input = tgt_input.at[1, -1].set(0)

    out = transformer_forward(params, src_input, tgt_input)
    out = jax.block_until_ready(out)

    assert out.shape == (B, T, tgt_vocab), out.shape
    assert bool(jnp.all(jnp.isfinite(out)))

    # Correctness check against a pure-JAX reference of the same (bf16-GEMM,
    # f32-accumulate) math.
    ref = jax.block_until_ready(transformer_forward_ref(params, src_input, tgt_input))
    max_err = float(jnp.max(jnp.abs(out - ref)))
    assert max_err < 5e-2, f"max abs error vs reference: {max_err}"

    print("KERNEL_OK")
</pallas_src>

<mosaic_0001>
module attributes {stable_mosaic.version = 11 : i64} {
  func.func @_mha_addnorm_kernel(%arg0: i32, %arg1: i32, %arg2: i32, %arg3: memref<1x8x32xf32, #tpu.memory_space<vmem>>, %arg4: memref<1x8x32xf32, #tpu.memory_space<vmem>>, %arg5: memref<1x8x1xf32, #tpu.memory_space<vmem>>, %arg6: memref<1x1x8xf32, #tpu.memory_space<vmem>>, %arg7: memref<1x32x8xbf16, #tpu.memory_space<vmem>>, %arg8: memref<1x32x8xbf16, #tpu.memory_space<vmem>>, %arg9: memref<1x32x8xbf16, #tpu.memory_space<vmem>>, %arg10: memref<1x8x32xbf16, #tpu.memory_space<vmem>>, %arg11: memref<1x32xf32, #tpu.memory_space<vmem>>, %arg12: memref<1x32xf32, #tpu.memory_space<vmem>>, %arg13: memref<1x32xf32, #tpu.memory_space<vmem>>, %arg14: memref<1x8x32xf32, #tpu.memory_space<vmem>>, %arg15: memref<8x32xf32, #tpu.memory_space<vmem>>) attributes {dimension_semantics = [#tpu.dimension_semantics<parallel>, #tpu.dimension_semantics<parallel>, #tpu.dimension_semantics<arbitrary>], iteration_bounds = array<i64: 2, 1, 4>, scalar_prefetch = 0 : i64, scratch_operands = 1 : i64, tpu.core_type = #tpu.core_type<tc>, window_params = [{transform_indices = @transform_0, window_bounds = array<i64: 1, 8, 32>}, {transform_indices = @transform_1, window_bounds = array<i64: 1, 8, 32>}, {transform_indices = @transform_2, window_bounds = array<i64: 1, 8, 1>}, {transform_indices = @transform_3, window_bounds = array<i64: 1, 1, 8>}, {transform_indices = @transform_4, window_bounds = array<i64: 1, 32, 8>}, {transform_indices = @transform_5, window_bounds = array<i64: 1, 32, 8>}, {transform_indices = @transform_6, window_bounds = array<i64: 1, 32, 8>}, {transform_indices = @transform_7, window_bounds = array<i64: 1, 8, 32>}, {pipeline_mode = #tpu.pipeline_mode<synchronous>, transform_indices = @transform_8, window_bounds = array<i64: 1, 32>}, {pipeline_mode = #tpu.pipeline_mode<synchronous>, transform_indices = @transform_9, window_bounds = array<i64: 1, 32>}, {pipeline_mode = #tpu.pipeline_mode<synchronous>, transform_indices = @transform_10, window_bounds = array<i64: 1, 32>}, {transform_indices = @transform_11, window_bounds = array<i64: 1, 8, 32>}]} {
    %c0_i32 = arith.constant 0 : i32
    %0 = arith.cmpi eq, %arg2, %c0_i32 : i32
    %1 = arith.extui %0 : i1 to i32
    %c0_i32_0 = arith.constant 0 : i32
    %2 = arith.cmpi ne, %1, %c0_i32_0 : i32
    scf.if %2 {
      %cst_38 = arith.constant 0.000000e+00 : f32
      %56 = vector.broadcast %cst_38 : f32 to vector<8x32xf32>
      %c0_39 = arith.constant 0 : index
      %c0_40 = arith.constant 0 : index
      %57 = vector.load %arg15[%c0_39, %c0_40] : memref<8x32xf32, #tpu.memory_space<vmem>>, vector<8x32xf32>
      tpu.vector_store %arg15[%c0_39, %c0_40], %56 {strides = array<i32>} : memref<8x32xf32, #tpu.memory_space<vmem>>, vector<8x32xf32>,
    } else {
    }
    %c0 = arith.constant 0 : index
    %c0_1 = arith.constant 0 : index
    %c0_2 = arith.constant 0 : index
    %3 = vector.load %arg3[%c0, %c0_1, %c0_2] : memref<1x8x32xf32, #tpu.memory_space<vmem>>, vector<1x8x32xf32>
    %4 = vector.shape_cast %3 : vector<1x8x32xf32> to vector<8x32xf32>
    %c0_3 = arith.constant 0 : index
    %c0_4 = arith.constant 0 : index
    %c0_5 = arith.constant 0 : index
    %5 = vector.load %arg4[%c0_3, %c0_4, %c0_5] : memref<1x8x32xf32, #tpu.memory_space<vmem>>, vector<1x8x32xf32>
    %6 = vector.shape_cast %5 : vector<1x8x32xf32> to vector<8x32xf32>
    %7 = arith.truncf %4 : vector<8x32xf32> to vector<8x32xbf16>
    %8 = arith.truncf %6 : vector<8x32xf32> to vector<8x32xbf16>
    %c0_6 = arith.constant 0 : index
    %c0_7 = arith.constant 0 : index
    %c0_8 = arith.constant 0 : index
    %9 = vector.load %arg7[%c0_6, %c0_7, %c0_8] : memref<1x32x8xbf16, #tpu.memory_space<vmem>>, vector<1x32x8xbf16>
    %10 = vector.shape_cast %9 : vector<1x32x8xbf16> to vector<32x8xbf16>
    %cst = arith.constant dense<0.000000e+00> : vector<8x8xf32>
    %11 = tpu.matmul %7, %10, %cst {dimension_numbers = #tpu.dot_dimension_numbers<[1], [0], [0], [1], [0, 0, 1, 1], [], []>} : vector<8x32xbf16>, vector<32x8xbf16>, vector<8x8xf32> -> vector<8x8xf32>
    %c0_9 = arith.constant 0 : index
    %c0_10 = arith.constant 0 : index
    %c0_11 = arith.constant 0 : index
    %12 = vector.load %arg8[%c0_9, %c0_10, %c0_11] : memref<1x32x8xbf16, #tpu.memory_space<vmem>>, vector<1x32x8xbf16>
    %13 = vector.shape_cast %12 : vector<1x32x8xbf16> to vector<32x8xbf16>
    %cst_12 = arith.constant dense<0.000000e+00> : vector<8x8xf32>
    %14 = tpu.matmul %8, %13, %cst_12 {dimension_numbers = #tpu.dot_dimension_numbers<[1], [0], [0], [1], [0, 0, 1, 1], [], []>} : vector<8x32xbf16>, vector<32x8xbf16>, vector<8x8xf32> -> vector<8x8xf32>
    %c0_13 = arith.constant 0 : index
    %c0_14 = arith.constant 0 : index
    %c0_15 = arith.constant 0 : index
    %15 = vector.load %arg9[%c0_13, %c0_14, %c0_15] : memref<1x32x8xbf16, #tpu.memory_space<vmem>>, vector<1x32x8xbf16>
    %16 = vector.shape_cast %15 : vector<1x32x8xbf16> to vector<32x8xbf16>
    %cst_16 = arith.constant dense<0.000000e+00> : vector<8x8xf32>
    %17 = tpu.matmul %8, %16, %cst_16 {dimension_numbers = #tpu.dot_dimension_numbers<[1], [0], [0], [1], [0, 0, 1, 1], [], []>} : vector<8x32xbf16>, vector<32x8xbf16>, vector<8x8xf32> -> vector<8x8xf32>
    %18 = arith.truncf %11 : vector<8x8xf32> to vector<8x8xbf16>
    %19 = arith.truncf %14 : vector<8x8xf32> to vector<8x8xbf16>
    %cst_17 = arith.constant dense<0.000000e+00> : vector<8x8xf32>
    %20 = tpu.matmul %18, %19, %cst_17 {dimension_numbers = #tpu.dot_dimension_numbers<[1], [1], [0], [0], [0, 0, 1, 0], [], []>} : vector<8x8xbf16>, vector<8x8xbf16>, vector<8x8xf32> -> vector<8x8xf32>
    %c0_18 = arith.constant 0 : index
    %c0_19 = arith.constant 0 : index
    %c0_20 = arith.constant 0 : index
    %21 = vector.load %arg5[%c0_18, %c0_19, %c0_20] : memref<1x8x1xf32, #tpu.memory_space<vmem>>, vector<1x8x1xf32>
    %22 = vector.shape_cast %21 : vector<1x8x1xf32> to vector<8x1xf32>
    %c0_21 = arith.constant 0 : index
    %c0_22 = arith.constant 0 : index
    %c0_23 = arith.constant 0 : index
    %23 = vector.load %arg6[%c0_21, %c0_22, %c0_23] : memref<1x1x8xf32, #tpu.memory_space<vmem>>, vector<1x1x8xf32>
    %24 = vector.shape_cast %23 : vector<1x1x8xf32> to vector<1x8xf32>
    %25 = vector.broadcast %22 : vector<8x1xf32> to vector<8x8xf32>
    %26 = vector.broadcast %24 : vector<1x8xf32> to vector<8x8xf32>
    %27 = arith.mulf %25, %26 : vector<8x8xf32>
    %28 = arith.mulf %20, %27 : vector<8x8xf32>
    %cst_24 = arith.constant 0.000000e+00 : f32
    %29 = vector.broadcast %cst_24 : f32 to vector<8x8xf32>
    %30 = arith.cmpf oeq, %28, %29 : vector<8x8xf32>
    %cst_25 = arith.constant 1.000000e-10 : f32
    %31 = vector.broadcast %cst_25 : f32 to vector<8x8xf32>
    %32 = arith.select %30, %31, %28 : vector<8x8xi1>, vector<8x8xf32>
    %cst_26 = arith.constant dense<0xFF800000> : vector<8xf32>
    %33 = vector.multi_reduction <maximumf>, %32, %cst_26 [1] : vector<8x8xf32> to vector<8xf32>
    %34 = vector.shape_cast %33 : vector<8xf32> to vector<8x1xf32>
    %35 = vector.broadcast %34 : vector<8x1xf32> to vector<8x8xf32>
    %36 = arith.subf %32, %35 : vector<8x8xf32>
    %37 = math.exp %36 : vector<8x8xf32>
    %cst_27 = arith.constant dense<0.000000e+00> : vector<8xf32>
    %38 = vector.multi_reduction <add>, %37, %cst_27 [1] : vector<8x8xf32> to vector<8xf32>
    %39 = vector.shape_cast %38 : vector<8xf32> to vector<8x1xf32>
    %40 = tpu.reciprocal %39 {approx = true} : vector<8x1xf32> -> vector<8x1xf32>
    %41 = vector.broadcast %40 : vector<8x1xf32> to vector<8x8xf32>
    %42 = arith.mulf %37, %41 : vector<8x8xf32>
    %43 = arith.truncf %42 : vector<8x8xf32> to vector<8x8xbf16>
    %44 = arith.truncf %17 : vector<8x8xf32> to vector<8x8xbf16>
    %cst_28 = arith.constant dense<0.000000e+00> : vector<8x8xf32>
    %45 = tpu.matmul %43, %44, %cst_28 {dimension_numbers = #tpu.dot_dimension_numbers<[1], [0], [0], [1], [0, 0, 1, 1], [], []>} : vector<8x8xbf16>, vector<8x8xbf16>, vector<8x8xf32> -> vector<8x8xf32>
    %c0_29 = arith.constant 0 : index
    %c0_30 = arith.constant 0 : index
    %46 = vector.load %arg15[%c0_29, %c0_30] : memref<8x32xf32, #tpu.memory_space<vmem>>, vector<8x32xf32>
    %47 = arith.truncf %45 : vector<8x8xf32> to vector<8x8xbf16>
    %c0_31 = arith.constant 0 : index
    %c0_32 = arith.constant 0 : index
    %c0_33 = arith.constant 0 : index
    %48 = vector.load %arg10[%c0_31, %c0_32, %c0_33] : memref<1x8x32xbf16, #tpu.memory_space<vmem>>, vector<1x8x32xbf16>
    %49 = vector.shape_cast %48 : vector<1x8x32xbf16> to vector<8x32xbf16>
    %cst_34 = arith.constant dense<0.000000e+00> : vector<8x32xf32>
    %50 = tpu.matmul %47, %49, %cst_34 {dimension_numbers = #tpu.dot_dimension_numbers<[1], [0], [0], [1], [0, 0, 1, 1], [], []>} : vector<8x8xbf16>, vector<8x32xbf16>, vector<8x32xf32> -> vector<8x32xf32>
    %51 = arith.addf %46, %50 : vector<8x32xf32>
    %c0_35 = arith.constant 0 : index
    %c0_36 = arith.constant 0 : index
    %52 = vector.load %arg15[%c0_35, %c0_36] : memref<8x32xf32, #tpu.memory_space<vmem>>, vector<8x32xf32>
    tpu.vector_store %arg15[%c0_35, %c0_36], %51 {strides = array<i32>} : memref<8x32xf32, #tpu.memory_space<vmem>>, vector<8x32xf32>,
    %c3_i32 = arith.constant 3 : i32
    %53 = arith.cmpi eq, %arg2, %c3_i32 : i32
    %54 = arith.extui %53 : i1 to i32
    %c0_i32_37 = arith.constant 0 : i32
    %55 = arith.cmpi ne, %54, %c0_i32_37 : i32
    scf.if %55 {
      %c0_38 = arith.constant 0 : index
      %c0_39 = arith.constant 0 : index
      %56 = vector.load %arg15[%c0_38, %c0_39] : memref<8x32xf32, #tpu.memory_space<vmem>>, vector<8x32xf32>
      %57 = arith.addf %4, %56 : vector<8x32xf32>
      %c0_40 = arith.constant 0 : index
      %c0_41 = arith.constant 0 : index
      %58 = vector.load %arg11[%c0_40, %c0_41] : memref<1x32xf32, #tpu.memory_space<vmem>>, vector<1x32xf32>
      %59 = vector.broadcast %58 : vector<1x32xf32> to vector<8x32xf32>
      %60 = arith.addf %57, %59 : vector<8x32xf32>
      %cst_42 = arith.constant dense<0.000000e+00> : vector<8xf32>
      %61 = vector.multi_reduction <add>, %60, %cst_42 [1] : vector<8x32xf32> to vector<8xf32>
      %62 = vector.shape_cast %61 : vector<8xf32> to vector<8x1xf32>
      %cst_43 = arith.constant 3.200000e+01 : f32
      %63 = vector.broadcast %cst_43 : f32 to vector<8x1xf32>
      %64 = arith.divf %62, %63 : vector<8x1xf32>
      %65 = vector.broadcast %64 : vector<8x1xf32> to vector<8x32xf32>
      %66 = arith.subf %60, %65 : vector<8x32xf32>
      %67 = arith.mulf %66, %66 : vector<8x32xf32>
      %cst_44 = arith.constant dense<0.000000e+00> : vector<8xf32>
      %68 = vector.multi_reduction <add>, %67, %cst_44 [1] : vector<8x32xf32> to vector<8xf32>
      %69 = vector.shape_cast %68 : vector<8xf32> to vector<8x1xf32>
      %cst_45 = arith.constant 3.200000e+01 : f32
      %70 = vector.broadcast %cst_45 : f32 to vector<8x1xf32>
      %71 = arith.divf %69, %70 : vector<8x1xf32>
      %72 = vector.broadcast %64 : vector<8x1xf32> to vector<8x32xf32>
      %73 = arith.subf %60, %72 : vector<8x32xf32>
      %cst_46 = arith.constant 9.99999997E-7 : f32
      %74 = vector.broadcast %cst_46 : f32 to vector<8x1xf32>
      %75 = arith.addf %71, %74 : vector<8x1xf32>
      %76 = math.rsqrt %75 : vector<8x1xf32>
      %77 = vector.broadcast %76 : vector<8x1xf32> to vector<8x32xf32>
      %78 = arith.mulf %73, %77 : vector<8x32xf32>
      %c0_47 = arith.constant 0 : index
      %c0_48 = arith.constant 0 : index
      %79 = vector.load %arg12[%c0_47, %c0_48] : memref<1x32xf32, #tpu.memory_space<vmem>>, vector<1x32xf32>
      %80 = vector.broadcast %79 : vector<1x32xf32> to vector<8x32xf32>
      %81 = arith.mulf %78, %80 : vector<8x32xf32>
      %c0_49 = arith.constant 0 : index
      %c0_50 = arith.constant 0 : index
      %82 = vector.load %arg13[%c0_49, %c0_50] : memref<1x32xf32, #tpu.memory_space<vmem>>, vector<1x32xf32>
      %83 = vector.broadcast %82 : vector<1x32xf32> to vector<8x32xf32>
      %84 = arith.addf %81, %83 : vector<8x32xf32>
      %c0_51 = arith.constant 0 : index
      %c0_52 = arith.constant 0 : index
      %c0_53 = arith.constant 0 : index
      %85 = vector.load %arg14[%c0_51, %c0_52, %c0_53] : memref<1x8x32xf32, #tpu.memory_space<vmem>>, vector<1x8x32xf32>
      %86 = vector.shape_cast %85 : vector<1x8x32xf32> to vector<8x32xf32>
      %87 = vector.shape_cast %84 : vector<8x32xf32> to vector<1x8x32xf32>
      tpu.vector_store %arg14[%c0_51, %c0_52, %c0_53], %87 {strides = array<i32>} : memref<1x8x32xf32, #tpu.memory_space<vmem>>, vector<1x8x32xf32>,
    } else {
    }
    return
  }
  func.func @transform_0(%arg0: i32, %arg1: i32, %arg2: i32) -> (i32, i32, i32) {
    %c0_i32 = arith.constant 0 : i32
    %c0_i32_0 = arith.constant 0 : i32
    return %arg0, %arg1, %c0_i32 : i32, i32, i32
  }
  func.func @transform_1(%arg0: i32, %arg1: i32, %arg2: i32) -> (i32, i32, i32) {
    %c0_i32 = arith.constant 0 : i32
    %c0_i32_0 = arith.constant 0 : i32
    %c0_i32_1 = arith.constant 0 : i32
    return %arg0, %c0_i32, %c0_i32_0 : i32, i32, i32
  }
  func.func @transform_2(%arg0: i32, %arg1: i32, %arg2: i32) -> (i32, i32, i32) {
    %c0_i32 = arith.constant 0 : i32
    %c0_i32_0 = arith.constant 0 : i32
    return %arg0, %arg1, %c0_i32 : i32, i32, i32
  }
  func.func @transform_3(%arg0: i32, %arg1: i32, %arg2: i32) -> (i32, i32, i32) {
    %c0_i32 = arith.constant 0 : i32
    %c0_i32_0 = arith.constant 0 : i32
    %c0_i32_1 = arith.constant 0 : i32
    return %arg0, %c0_i32, %c0_i32_0 : i32, i32, i32
  }
  func.func @transform_4(%arg0: i32, %arg1: i32, %arg2: i32) -> (i32, i32, i32) {
    %c0_i32 = arith.constant 0 : i32
    %c0_i32_0 = arith.constant 0 : i32
    %c0_i32_1 = arith.constant 0 : i32
    return %arg2, %c0_i32, %c0_i32_0 : i32, i32, i32
  }
  func.func @transform_5(%arg0: i32, %arg1: i32, %arg2: i32) -> (i32, i32, i32) {
    %c0_i32 = arith.constant 0 : i32
    %c0_i32_0 = arith.constant 0 : i32
    %c0_i32_1 = arith.constant 0 : i32
    return %arg2, %c0_i32, %c0_i32_0 : i32, i32, i32
  }
  func.func @transform_6(%arg0: i32, %arg1: i32, %arg2: i32) -> (i32, i32, i32) {
    %c0_i32 = arith.constant 0 : i32
    %c0_i32_0 = arith.constant 0 : i32
    %c0_i32_1 = arith.constant 0 : i32
    return %arg2, %c0_i32, %c0_i32_0 : i32, i32, i32
  }
  func.func @transform_7(%arg0: i32, %arg1: i32, %arg2: i32) -> (i32, i32, i32) {
    %c0_i32 = arith.constant 0 : i32
    %c0_i32_0 = arith.constant 0 : i32
    %c0_i32_1 = arith.constant 0 : i32
    return %arg2, %c0_i32, %c0_i32_0 : i32, i32, i32
  }
  func.func @transform_8(%arg0: i32, %arg1: i32, %arg2: i32) -> (i32, i32) {
    %c0_i32 = arith.constant 0 : i32
    %c0_i32_0 = arith.constant 0 : i32
    %c0_i32_1 = arith.constant 0 : i32
    return %c0_i32, %c0_i32_0 : i32, i32
  }
  func.func @transform_9(%arg0: i32, %arg1: i32, %arg2: i32) -> (i32, i32) {
    %c0_i32 = arith.constant 0 : i32
    %c0_i32_0 = arith.constant 0 : i32
    %c0_i32_1 = arith.constant 0 : i32
    return %c0_i32, %c0_i32_0 : i32, i32
  }
  func.func @transform_10(%arg0: i32, %arg1: i32, %arg2: i32) -> (i32, i32) {
    %c0_i32 = arith.constant 0 : i32
    %c0_i32_0 = arith.constant 0 : i32
    %c0_i32_1 = arith.constant 0 : i32
    return %c0_i32, %c0_i32_0 : i32, i32
  }
  func.func @transform_11(%arg0: i32, %arg1: i32, %arg2: i32) -> (i32, i32, i32) {
    %c0_i32 = arith.constant 0 : i32
    %c0_i32_0 = arith.constant 0 : i32
    return %arg0, %arg1, %c0_i32 : i32, i32, i32
  }
}

</mosaic_0001>

<llo_original>
// kernel: tpu_custom_call.1
$region0: #{tpu_custom_call.1}
  #allocation0 [shape = 'u32[]', space=smem, size = 0x4, offset = 0x4, fixed_abs, tag = 'smem constant byte address 0x4 - core index']
  #allocation1 [shape = 'u32[144,128]{1,0:T(1,128)}', space=vmem, size = 0x12000, scoped, tag = 'internal scratch']
  #allocation2 [shape = 'f32[8,32]{1,0:T(8,128)}', space=vmem, size = 0x1000, scoped, tag = 'scratch operand']
  %s0 = inlined_call_operand.vmem [shape: f32[2,8,32], index: 0, kind: input, shape index: {}]
  %s1 = inlined_call_operand.vmem [shape: f32[2,8,32], index: 1, kind: input, shape index: {}]
  %s2 = inlined_call_operand.vmem [shape: f32[2,8,1], index: 2, kind: input, shape index: {}]
  %s3 = inlined_call_operand.vmem [shape: f32[2,1,8], index: 3, kind: input, shape index: {}]
  %s4 = inlined_call_operand.vmem [shape: bf16[4,32,8], index: 4, kind: input, shape index: {}]
  %s5 = inlined_call_operand.vmem [shape: bf16[4,32,8], index: 5, kind: input, shape index: {}]
  %s6 = inlined_call_operand.vmem [shape: bf16[4,32,8], index: 6, kind: input, shape index: {}]
  %s7 = inlined_call_operand.vmem [shape: bf16[4,8,32], index: 7, kind: input, shape index: {}]
  %s8 = inlined_call_operand.vmem [shape: f32[1,32], index: 8, kind: input, shape index: {}]
  %s9 = inlined_call_operand.vmem [shape: f32[1,32], index: 9, kind: input, shape index: {}]
  %s10 = inlined_call_operand.vmem [shape: f32[1,32], index: 10, kind: input, shape index: {}]
  %s11 = inlined_call_operand.hbm [shape: f32[2,8,32], index: 11, kind: output, shape index: {}]
  %s12 = sld [smem:[#allocation0]]
  $region85: #{tpu_custom_call.1} parent=0
    _
  %s14 = ssub.s32 1, %s12
  %s15 = scalar_select 0, %s14, %s12
  $region1: #{tpu_custom_call.1} parent=0
    #allocation3 [shape = 'u8[8192]{0}', space=vmem, size = 0x2000, scoped, tag = 'output window, operand 0']
    #allocation4 [shape = 's32[2]{0}', space=sflag, size = 0x8, scoped, tag = 'scoped memory for tpu_custom_call.1']
    %16 = vsyncpa [#allocation4], 0
    %s17 = scalar_lea.sflag [#allocation4], 1
    %18 = vsyncpa %s17, 0
    loop: start=0, step=1, limit=10
    $region2: #{tpu_custom_call.1} parent=1 // loop_pre_header
      _
    $region3: #{tpu_custom_call.1} parent=1 // loop_header
      %s20 = sphi 0, %s24
      %p21 = scmp.ge.s32.totalorder %s20, 10
      %s27 = sphi 0, %s46
      %s28 = sphi 0, %s42
      %s29 = sphi 0, %s38
      %s30 = sphi 0, %s27
      %s31 = sphi 0, %s28
      %s32 = sphi 0, %s29
      %s33 = sphi 0, %s30
      %s34 = sphi 0, %s31
      %s35 = sphi 0, %s32
      %s51 = sphi 0, %s53
      %s54 = sphi 0, %s51
      %s55 = sphi 0, %s54
      %s71 = sphi 0, %s55
      %s77 = sphi 0, %s79
      %s80 = sphi 0, %s77
      %s81 = sphi 0, %s80
      %s97 = sphi 0, %s81
      %s105 = sphi 0, %s107
      %s108 = sphi 0, %s105
      %s109 = sphi 0, %s108
      %s125 = sphi 0, %s109
      %s131 = sphi 0, %s133
      %s134 = sphi 0, %s131
      %s135 = sphi 0, %s134
      %s151 = sphi 0, %s135
      %s157 = sphi 0, %s159
      %s160 = sphi 0, %s157
      %s161 = sphi 0, %s160
      %s177 = sphi 0, %s161
      %s183 = sphi 0, %s185
      %s186 = sphi 0, %s183
      %s187 = sphi 0, %s186
      %s203 = sphi 0, %s187
      %s209 = sphi 0, %s211
      %s212 = sphi 0, %s209
      %s213 = sphi 0, %s212
      %s229 = sphi 0, %s213
      %s235 = sphi 0, %s237
      %s238 = sphi 0, %s235
      %s239 = sphi 0, %s238
      %s255 = sphi 0, %s239
      %s259 = sphi 0, %s259
      %s261 = sphi 0, %s259
      %s262 = sphi 0, %s261
      %s276 = sphi 0, %s262
      %s280 = sphi 0, %s280
      %s282 = sphi 0, %s280
      %s283 = sphi 0, %s282
      %s297 = sphi 0, %s283
      %s301 = sphi 0, %s301
      %s303 = sphi 0, %s301
      %s304 = sphi 0, %s303
      %s318 = sphi 0, %s304
      %s326 = sphi 0, %s328
      %s329 = sphi 0, %s326
      %s330 = sphi 0, %s329
      %s346 = sphi 0, %s330
    $region4: #{tpu_custom_call.1} parent=1 // loop_header_branch
      %23 = sbr.rel (%p21) target = $region8
    $region5: #{tpu_custom_call.1} parent=1 // loop_body
      %s25 = ssub.s32 %s20, 1
      %s26 = ssub.s32 %s20, 2
      %s36 = sadd.s32 1, %s29
      %p37 = scmp.ge.s32.totalorder %s36, 4
      %s38 = scalar_select %p37, 0, %s36
      %s39 = sadd.s32 1, %s28
      %s40 = scalar_select %p37, %s39, %s28
      %p41 = scmp.ge.s32.totalorder %s40, 1
      %s42 = scalar_select %p41, 0, %s40
      %s43 = sadd.s32 1, %s27
      %s44 = scalar_select %p41, %s43, %s27
      %p45 = scmp.ge.s32.totalorder %s44, 2
      %s46 = scalar_select %p45, 0, %s44
      %s47 = ssub.s32 %s27, %s46
      %s48 = ssub.s32 %s28, %s42
      %s49 = sor.u32 %s47, %s48
      %p50 = scmp.eq.s32.totalorder %s49, 0
      %s52 = sadd.s32 %s51, 1
      %s53 = scalar_select %p50, %s51, %s52
      %p56 = pneg %p50
      %p57 = scmp.eq.s32.totalorder %s20, 7
      %p58 = por %p56, %p57
      %p59 = scmp.ne.s32.totalorder %s51, %s54
      %p60 = scmp.eq.s32.totalorder %s20, 0
      %p61 = por %p59, %p60
      %p62 = scmp.ne.s32.totalorder %s51, %s54
      %p63 = scmp.eq.s32.totalorder %s25, 7
      %p64 = por %p62, %p63
      %p65 = scmp.ne.s32.totalorder %s54, %s55
      %p66 = scmp.eq.s32.totalorder %s25, 0
      %p67 = por %p65, %p66
      %p68 = scmp.ne.s32.totalorder %s54, %s55
      %p69 = scmp.eq.s32.totalorder %s26, 7
      %p70 = por %p68, %p69
      %p72 = scmp.ne.s32.totalorder %s55, %s71
      %p73 = scmp.eq.s32.totalorder %s26, 0
      %p74 = por %p72, %p73
      %s75 = ssub.s32 %s27, %s46
      %p76 = scmp.eq.s32.totalorder %s75, 0
      %s78 = sadd.s32 %s77, 1
      %s79 = scalar_select %p76, %s77, %s78
      %p82 = pneg %p76
      %p83 = scmp.eq.s32.totalorder %s20, 7
      %p84 = por %p82, %p83
      %p85 = scmp.ne.s32.totalorder %s77, %s80
      %p86 = scmp.eq.s32.totalorder %s20, 0
      %p87 = por %p85, %p86
      %p88 = scmp.ne.s32.totalorder %s77, %s80
      %p89 = scmp.eq.s32.totalorder %s25, 7
      %p90 = por %p88, %p89
      %p91 = scmp.ne.s32.totalorder %s80, %s81
      %p92 = scmp.eq.s32.totalorder %s25, 0
      %p93 = por %p91, %p92
      %p94 = scmp.ne.s32.totalorder %s80, %s81
      %p95 = scmp.eq.s32.totalorder %s26, 7
      %p96 = por %p94, %p95
      %p98 = scmp.ne.s32.totalorder %s81, %s97
      %p99 = scmp.eq.s32.totalorder %s26, 0
      %p100 = por %p98, %p99
      %s101 = ssub.s32 %s27, %s46
      %s102 = ssub.s32 %s28, %s42
      %s103 = sor.u32 %s101, %s102
      %p104 = scmp.eq.s32.totalorder %s103, 0
      %s106 = sadd.s32 %s105, 1
      %s107 = scalar_select %p104, %s105, %s106
      %p110 = pneg %p104
      %p111 = scmp.eq.s32.totalorder %s20, 7
      %p112 = por %p110, %p111
      %p113 = scmp.ne.s32.totalorder %s105, %s108
      %p114 = scmp.eq.s32.totalorder %s20, 0
      %p115 = por %p113, %p114
      %p116 = scmp.ne.s32.totalorder %s105, %s108
      %p117 = scmp.eq.s32.totalorder %s25, 7
      %p118 = por %p116, %p117
      %p119 = scmp.ne.s32.totalorder %s108, %s109
      %p120 = scmp.eq.s32.totalorder %s25, 0
      %p121 = por %p119, %p120
      %p122 = scmp.ne.s32.totalorder %s108, %s109
      %p123 = scmp.eq.s32.totalorder %s26, 7
      %p124 = por %p122, %p123
      %p126 = scmp.ne.s32.totalorder %s109, %s125
      %p127 = scmp.eq.s32.totalorder %s26, 0
      %p128 = por %p126, %p127
      %s129 = ssub.s32 %s27, %s46
      %p130 = scmp.eq.s32.totalorder %s129, 0
      %s132 = sadd.s32 %s131, 1
      %s133 = scalar_select %p130, %s131, %s132
      %p136 = pneg %p130
      %p137 = scmp.eq.s32.totalorder %s20, 7
      %p138 = por %p136, %p137
      %p139 = scmp.ne.s32.totalorder %s131, %s134
      %p140 = scmp.eq.s32.totalorder %s20, 0
      %p141 = por %p139, %p140
      %p142 = scmp.ne.s32.totalorder %s131, %s134
      %p143 = scmp.eq.s32.totalorder %s25, 7
      %p144 = por %p142, %p143
      %p145 = scmp.ne.s32.totalorder %s134, %s135
      %p146 = scmp.eq.s32.totalorder %s25, 0
      %p147 = por %p145, %p146
      %p148 = scmp.ne.s32.totalorder %s134, %s135
      %p149 = scmp.eq.s32.totalorder %s26, 7
      %p150 = por %p148, %p149
      %p152 = scmp.ne.s32.totalorder %s135, %s151
      %p153 = scmp.eq.s32.totalorder %s26, 0
      %p154 = por %p152, %p153
      %s155 = ssub.s32 %s29, %s38
      %p156 = scmp.eq.s32.totalorder %s155, 0
      %s158 = sadd.s32 %s157, 1
      %s159 = scalar_select %p156, %s157, %s158
      %p162 = pneg %p156
      %p163 = scmp.eq.s32.totalorder %s20, 7
      %p164 = por %p162, %p163
      %p165 = scmp.ne.s32.totalorder %s157, %s160
      %p166 = scmp.eq.s32.totalorder %s20, 0
      %p167 = por %p165, %p166
      %p168 = scmp.ne.s32.totalorder %s157, %s160
      %p169 = scmp.eq.s32.totalorder %s25, 7
      %p170 = por %p168, %p169
      %p171 = scmp.ne.s32.totalorder %s160, %s161
      %p172 = scmp.eq.s32.totalorder %s25, 0
      %p173 = por %p171, %p172
      %p174 = scmp.ne.s32.totalorder %s160, %s161
      %p175 = scmp.eq.s32.totalorder %s26, 7
      %p176 = por %p174, %p175
      %p178 = scmp.ne.s32.totalorder %s161, %s177
      %p179 = scmp.eq.s32.totalorder %s26, 0
      %p180 = por %p178, %p179
      %s181 = ssub.s32 %s29, %s38
      %p182 = scmp.eq.s32.totalorder %s181, 0
      %s184 = sadd.s32 %s183, 1
      %s185 = scalar_select %p182, %s183, %s184
      %p188 = pneg %p182
      %p189 = scmp.eq.s32.totalorder %s20, 7
      %p190 = por %p188, %p189
      %p191 = scmp.ne.s32.totalorder %s183, %s186
      %p192 = scmp.eq.s32.totalorder %s20, 0
      %p193 = por %p191, %p192
      %p194 = scmp.ne.s32.totalorder %s183, %s186
      %p195 = scmp.eq.s32.totalorder %s25, 7
      %p196 = por %p194, %p195
      %p197 = scmp.ne.s32.totalorder %s186, %s187
      %p198 = scmp.eq.s32.totalorder %s25, 0
      %p199 = por %p197, %p198
      %p200 = scmp.ne.s32.totalorder %s186, %s187
      %p201 = scmp.eq.s32.totalorder %s26, 7
      %p202 = por %p200, %p201
      %p204 = scmp.ne.s32.totalorder %s187, %s203
      %p205 = scmp.eq.s32.totalorder %s26, 0
      %p206 = por %p204, %p205
      %s207 = ssub.s32 %s29, %s38
      %p208 = scmp.eq.s32.totalorder %s207, 0
      %s210 = sadd.s32 %s209, 1
      %s211 = scalar_select %p208, %s209, %s210
      %p214 = pneg %p208
      %p215 = scmp.eq.s32.totalorder %s20, 7
      %p216 = por %p214, %p215
      %p217 = scmp.ne.s32.totalorder %s209, %s212
      %p218 = scmp.eq.s32.totalorder %s20, 0
      %p219 = por %p217, %p218
      %p220 = scmp.ne.s32.totalorder %s209, %s212
      %p221 = scmp.eq.s32.totalorder %s25, 7
      %p222 = por %p220, %p221
      %p223 = scmp.ne.s32.totalorder %s212, %s213
      %p224 = scmp.eq.s32.totalorder %s25, 0
      %p225 = por %p223, %p224
      %p226 = scmp.ne.s32.totalorder %s212, %s213
      %p227 = scmp.eq.s32.totalorder %s26, 7
      %p228 = por %p226, %p227
      %p230 = scmp.ne.s32.totalorder %s213, %s229
      %p231 = scmp.eq.s32.totalorder %s26, 0
      %p232 = por %p230, %p231
      %s233 = ssub.s32 %s29, %s38
      %p234 = scmp.eq.s32.totalorder %s233, 0
      %s236 = sadd.s32 %s235, 1
      %s237 = scalar_select %p234, %s235, %s236
      %p240 = pneg %p234
      %p241 = scmp.eq.s32.totalorder %s20, 7
      %p242 = por %p240, %p241
      %p243 = scmp.ne.s32.totalorder %s235, %s238
      %p244 = scmp.eq.s32.totalorder %s20, 0
      %p245 = por %p243, %p244
      %p246 = scmp.ne.s32.totalorder %s235, %s238
      %p247 = scmp.eq.s32.totalorder %s25, 7
      %p248 = por %p246, %p247
      %p249 = scmp.ne.s32.totalorder %s238, %s239
      %p250 = scmp.eq.s32.totalorder %s25, 0
      %p251 = por %p249, %p250
      %p252 = scmp.ne.s32.totalorder %s238, %s239
      %p253 = scmp.eq.s32.totalorder %s26, 7
      %p254 = por %p252, %p253
      %p256 = scmp.ne.s32.totalorder %s239, %s255
      %p257 = scmp.eq.s32.totalorder %s26, 0
      %p258 = por %p256, %p257
      %s260 = sadd.s32 %s259, 1
      %p263 = scmp.eq.s32.totalorder %s20, 7
      %p264 = scmp.ne.s32.totalorder %s259, %s261
      %p265 = scmp.eq.s32.totalorder %s20, 0
      %p266 = por %p264, %p265
      %p267 = scmp.ne.s32.totalorder %s259, %s261
      %p268 = scmp.eq.s32.totalorder %s25, 7
      %p269 = por %p267, %p268
      %p270 = scmp.ne.s32.totalorder %s261, %s262
      %p271 = scmp.eq.s32.totalorder %s25, 0
      %p272 = por %p270, %p271
      %p273 = scmp.ne.s32.totalorder %s261, %s262
      %p274 = scmp.eq.s32.totalorder %s26, 7
      %p275 = por %p273, %p274
      %p277 = scmp.ne.s32.totalorder %s262, %s276
      %p278 = scmp.eq.s32.totalorder %s26, 0
      %p279 = por %p277, %p278
      %s281 = sadd.s32 %s280, 1
      %p284 = scmp.eq.s32.totalorder %s20, 7
      %p285 = scmp.ne.s32.totalorder %s280, %s282
      %p286 = scmp.eq.s32.totalorder %s20, 0
      %p287 = por %p285, %p286
      %p288 = scmp.ne.s32.totalorder %s280, %s282
      %p289 = scmp.eq.s32.totalorder %s25, 7
      %p290 = por %p288, %p289
      %p291 = scmp.ne.s32.totalorder %s282, %s283
      %p292 = scmp.eq.s32.totalorder %s25, 0
      %p293 = por %p291, %p292
      %p294 = scmp.ne.s32.totalorder %s282, %s283
      %p295 = scmp.eq.s32.totalorder %s26, 7
      %p296 = por %p294, %p295
      %p298 = scmp.ne.s32.totalorder %s283, %s297
      %p299 = scmp.eq.s32.totalorder %s26, 0
      %p300 = por %p298, %p299
      %s302 = sadd.s32 %s301, 1
      %p305 = scmp.eq.s32.totalorder %s20, 7
      %p306 = scmp.ne.s32.totalorder %s301, %s303
      %p307 = scmp.eq.s32.totalorder %s20, 0
      %p308 = por %p306, %p307
      %p309 = scmp.ne.s32.totalorder %s301, %s303
      %p310 = scmp.eq.s32.totalorder %s25, 7
      %p311 = por %p309, %p310
      %p312 = scmp.ne.s32.totalorder %s303, %s304
      %p313 = scmp.eq.s32.totalorder %s25, 0
      %p314 = por %p312, %p313
      %p315 = scmp.ne.s32.totalorder %s303, %s304
      %p316 = scmp.eq.s32.totalorder %s26, 7
      %p317 = por %p315, %p316
      %p319 = scmp.ne.s32.totalorder %s304, %s318
      %p320 = scmp.eq.s32.totalorder %s26, 0
      %p321 = por %p319, %p320
      %s322 = ssub.s32 %s27, %s46
      %s323 = ssub.s32 %s28, %s42
      %s324 = sor.u32 %s322, %s323
      %p325 = scmp.eq.s32.totalorder %s324, 0
      %s327 = sadd.s32 %s326, 1
      %s328 = scalar_select %p325, %s326, %s327
      %p331 = pneg %p325
      %p332 = scmp.eq.s32.totalorder %s20, 7
      %p333 = por %p331, %p332
      %p334 = scmp.ne.s32.totalorder %s326, %s329
      %p335 = scmp.eq.s32.totalorder %s20, 0
      %p336 = por %p334, %p335
      %p337 = scmp.ne.s32.totalorder %s326, %s329
      %p338 = scmp.eq.s32.totalorder %s25, 7
      %p339 = por %p337, %p338
      %p340 = scmp.ne.s32.totalorder %s329, %s330
      %p341 = scmp.eq.s32.totalorder %s25, 0
      %p342 = por %p340, %p341
      %p343 = scmp.ne.s32.totalorder %s329, %s330
      %p344 = scmp.eq.s32.totalorder %s26, 7
      %p345 = por %p343, %p344
      %p347 = scmp.ne.s32.totalorder %s330, %s346
      %p348 = scmp.eq.s32.totalorder %s26, 0
      %p349 = por %p347, %p348
      %p350 = scmp.le.s32.totalorder 1, %s20
      %p351 = scmp.lt.s32.totalorder %s20, 9
      %p352 = pnand %p350, %p351
      %p353 = pneg %p352
      // Predicated region
      $region9: #{tpu_custom_call.1} parent=5 // pred_check
        _
      $region10: #{tpu_custom_call.1} parent=5 // pred_check_branch
        %355 = sbr.rel (%p352) target = $region12
      $region11: #{tpu_custom_call.1} parent=5 // pred_region
        %s356 = ssub.s32 %s20, 1
        // Predicated region
        $region13: #{tpu_custom_call.1} parent=11 // pred_check
          %p357 = pneg %p272
        $region14: #{tpu_custom_call.1} parent=11 // pred_check_branch
          %359 = sbr.rel (%p357) target = $region16
        $region15: #{tpu_custom_call.1} parent=11 // pred_region
          _
        $region16: #{tpu_custom_call.1} parent=11 // pred_fallthru
          _
        // Predicated region
        $region17: #{tpu_custom_call.1} parent=11 // pred_check
          %p360 = pneg %p293
        $region18: #{tpu_custom_call.1} parent=11 // pred_check_branch
          %362 = sbr.rel (%p360) target = $region20
        $region19: #{tpu_custom_call.1} parent=11 // pred_region
          _
        $region20: #{tpu_custom_call.1} parent=11 // pred_fallthru
          _
        // Predicated region
        $region21: #{tpu_custom_call.1} parent=11 // pred_check
          %p363 = pneg %p314
        $region22: #{tpu_custom_call.1} parent=11 // pred_check_branch
          %365 = sbr.rel (%p363) target = $region24
        $region23: #{tpu_custom_call.1} parent=11 // pred_region
          _
        $region24: #{tpu_custom_call.1} parent=11 // pred_fallthru
          _
      $region12: #{tpu_custom_call.1} parent=5 // pred_fallthru
        _
      %p366 = scmp.lt.s32.totalorder %s20, 8
      // Predicated region
      $region25: #{tpu_custom_call.1} parent=5 // pred_check
        %p367 = pneg %p366
      $region26: #{tpu_custom_call.1} parent=5 // pred_check_branch
        %369 = sbr.rel (%p367) target = $region28
      $region27: #{tpu_custom_call.1} parent=5 // pred_region
        // Predicated region
        $region29: #{tpu_custom_call.1} parent=27 // pred_check
          %p370 = pneg %p61
        $region30: #{tpu_custom_call.1} parent=27 // pred_check_branch
          %372 = sbr.rel (%p370) target = $region32
        $region31: #{tpu_custom_call.1} parent=27 // pred_region
          %p373 = scmp.lt.s32.totalorder %s27, 1
          %s374 = scalar_select %p373, %s27, 1
          %p375 = scmp.lt.s32.totalorder %s28, 0
          %s376 = scalar_select %p375, %s28, 0
          %s377 = sadd.s32 %s376, %s374
          %s378 = smul.addr %s377, 8
          %s379 = scalar_lea.vmem %s0, %s378
        $region32: #{tpu_custom_call.1} parent=27 // pred_fallthru
          _
        // Predicated region
        $region33: #{tpu_custom_call.1} parent=27 // pred_check
          %p380 = pneg %p87
        $region34: #{tpu_custom_call.1} parent=27 // pred_check_branch
          %382 = sbr.rel (%p380) target = $region36
        $region35: #{tpu_custom_call.1} parent=27 // pred_region
          %p383 = scmp.lt.s32.totalorder %s27, 1
          %s384 = scalar_select %p383, %s27, 1
          %s385 = smul.addr %s384, 8
          %s386 = scalar_lea.vmem %s1, %s385
        $region36: #{tpu_custom_call.1} parent=27 // pred_fallthru
          _
        // Predicated region
        $region37: #{tpu_custom_call.1} parent=27 // pred_check
          %p387 = pneg %p115
        $region38: #{tpu_custom_call.1} parent=27 // pred_check_branch
          %389 = sbr.rel (%p387) target = $region40
        $region39: #{tpu_custom_call.1} parent=27 // pred_region
          %p390 = scmp.lt.s32.totalorder %s27, 1
          %s391 = scalar_select %p390, %s27, 1
          %p392 = scmp.lt.s32.totalorder %s28, 0
          %s393 = scalar_select %p392, %s28, 0
          %s394 = sadd.s32 %s393, %s391
          %s395 = smul.addr %s394, 8
          %s396 = scalar_lea.vmem %s2, %s395
        $region40: #{tpu_custom_call.1} parent=27 // pred_fallthru
          _
        // Predicated region
        $region41: #{tpu_custom_call.1} parent=27 // pred_check
          %p397 = pneg %p141
        $region42: #{tpu_custom_call.1} parent=27 // pred_check_branch
          %399 = sbr.rel (%p397) target = $region44
        $region43: #{tpu_custom_call.1} parent=27 // pred_region
          %p400 = scmp.lt.s32.totalorder %s27, 1
          %s401 = scalar_select %p400, %s27, 1
          %s402 = scalar_lea.vmem %s3, %s401
        $region44: #{tpu_custom_call.1} parent=27 // pred_fallthru
          _
        // Predicated region
        $region45: #{tpu_custom_call.1} parent=27 // pred_check
          %p403 = pneg %p167
        $region46: #{tpu_custom_call.1} parent=27 // pred_check_branch
          %405 = sbr.rel (%p403) target = $region48
        $region47: #{tpu_custom_call.1} parent=27 // pred_region
          %p406 = scmp.lt.s32.totalorder %s29, 3
          %s407 = scalar_select %p406, %s29, 3
          %s408 = smul.addr %s407, 4
          %s409 = smul.addr %s408, 4
          %s410 = scalar_lea.vmem %s4, %s409
        $region48: #{tpu_custom_call.1} parent=27 // pred_fallthru
          _
        // Predicated region
        $region49: #{tpu_custom_call.1} parent=27 // pred_check
          %p411 = pneg %p193
        $region50: #{tpu_custom_call.1} parent=27 // pred_check_branch
          %413 = sbr.rel (%p411) target = $region52
        $region51: #{tpu_custom_call.1} parent=27 // pred_region
          %p414 = scmp.lt.s32.totalorder %s29, 3
          %s415 = scalar_select %p414, %s29, 3
          %s416 = smul.addr %s415, 4
          %s417 = smul.addr %s416, 4
          %s418 = scalar_lea.vmem %s5, %s417
        $region52: #{tpu_custom_call.1} parent=27 // pred_fallthru
          _
        // Predicated region
        $region53: #{tpu_custom_call.1} parent=27 // pred_check
          %p419 = pneg %p219
        $region54: #{tpu_custom_call.1} parent=27 // pred_check_branch
          %421 = sbr.rel (%p419) target = $region56
        $region55: #{tpu_custom_call.1} parent=27 // pred_region
          %p422 = scmp.lt.s32.totalorder %s29, 3
          %s423 = scalar_select %p422, %s29, 3
          %s424 = smul.addr %s423, 4
          %s425 = smul.addr %s424, 4
          %s426 = scalar_lea.vmem %s6, %s425
        $region56: #{tpu_custom_call.1} parent=27 // pred_fallthru
          _
        // Predicated region
        $region57: #{tpu_custom_call.1} parent=27 // pred_check
          %p427 = pneg %p245
        $region58: #{tpu_custom_call.1} parent=27 // pred_check_branch
          %429 = sbr.rel (%p427) target = $region60
        $region59: #{tpu_custom_call.1} parent=27 // pred_region
          %p430 = scmp.lt.s32.totalorder %s29, 3
          %s431 = scalar_select %p430, %s29, 3
          %s432 = smul.addr %s431, 4
          %s433 = scalar_lea.vmem %s7, %s432
        $region60: #{tpu_custom_call.1} parent=27 // pred_fallthru
          _
      $region28: #{tpu_custom_call.1} parent=5 // pred_fallthru
        _
      %p434 = scmp.le.s32.totalorder 1, %s20
      %p435 = scmp.lt.s32.totalorder %s20, 9
      %p436 = pnand %p434, %p435
      %p437 = pneg %p436
      // Predicated region
      $region61: #{tpu_custom_call.1} parent=5 // pred_check
        _
      $region62: #{tpu_custom_call.1} parent=5 // pred_check_branch
        %439 = sbr.rel (%p436) target = $region64
      $region63: #{tpu_custom_call.1} parent=5 // pred_region
        %s440 = ssub.s32 %s20, 1
        %p441 = scmp.lt.s32.totalorder %s30, 1
        %s442 = scalar_select %p441, %s30, 1
        %p443 = scmp.lt.s32.totalorder %s31, 0
        %s444 = scalar_select %p443, %s31, 0
        %s445 = sadd.s32 %s444, %s442
        %s446 = smul.addr %s445, 8
        %s447 = scalar_lea.vmem %s0, %s446
        %p448 = pneg %p67
        %p449 = pneg %p64
        %p450 = scmp.lt.s32.totalorder %s30, 1
        %s451 = scalar_select %p450, %s30, 1
        %s452 = smul.addr %s451, 8
        %s453 = scalar_lea.vmem %s1, %s452
        %p454 = pneg %p93
        %p455 = pneg %p90
        %p456 = scmp.lt.s32.totalorder %s30, 1
        %s457 = scalar_select %p456, %s30, 1
        %p458 = scmp.lt.s32.totalorder %s31, 0
        %s459 = scalar_select %p458, %s31, 0
        %s460 = sadd.s32 %s459, %s457
        %s461 = smul.addr %s460, 8
        %s462 = scalar_lea.vmem %s2, %s461
        %p463 = pneg %p121
        %p464 = pneg %p118
        %p465 = scmp.lt.s32.totalorder %s30, 1
        %s466 = scalar_select %p465, %s30, 1
        %s467 = scalar_lea.vmem %s3, %s466
        %p468 = pneg %p147
        %p469 = pneg %p144
        %p470 = scmp.lt.s32.totalorder %s32, 3
        %s471 = scalar_select %p470, %s32, 3
        %s472 = smul.addr %s471, 4
        %s473 = smul.addr %s472, 4
        %s474 = scalar_lea.vmem %s4, %s473
        %p475 = pneg %p173
        %p476 = pneg %p170
        %p477 = scmp.lt.s32.totalorder %s32, 3
        %s478 = scalar_select %p477, %s32, 3
        %s479 = smul.addr %s478, 4
        %s480 = smul.addr %s479, 4
        %s481 = scalar_lea.vmem %s5, %s480
        %p482 = pneg %p199
        %p483 = pneg %p196
        %p484 = scmp.lt.s32.totalorder %s32, 3
        %s485 = scalar_select %p484, %s32, 3
        %s486 = smul.addr %s485, 4
        %s487 = smul.addr %s486, 4
        %s488 = scalar_lea.vmem %s6, %s487
        %p489 = pneg %p225
        %p490 = pneg %p222
        %p491 = scmp.lt.s32.totalorder %s32, 3
        %s492 = scalar_select %p491, %s32, 3
        %s493 = smul.addr %s492, 4
        %s494 = scalar_lea.vmem %s7, %s493
        %p495 = pneg %p251
        %p496 = pneg %p248
        %p497 = pneg %p272
        %p498 = pneg %p269
        %p499 = pneg %p293
        %p500 = pneg %p290
        %p501 = pneg %p314
        %p502 = pneg %p311
        %p503 = pneg %p342
        %p504 = pneg %p339
        %s505 = sand.u32 %s329, 1
        %s506 = scalar_lea.sflag [#allocation4], %s505
        %s507 = sand.u32 %s329, 1
        %s508 = smul.addr %s507, 8
        %s509 = scalar_lea.vmem [#allocation3], %s508
        %p510 = scmp.lt.s32.totalorder %s30, 1
        %s511 = scalar_select %p510, %s30, 1
        %p512 = scmp.lt.s32.totalorder %s31, 0
        %s513 = scalar_select %p512, %s31, 0
        %s514 = sadd.s32 %s513, %s511
        %s515 = smul.addr %s514, 8
        %s516 = scalar_lea.vmem %s0, %s515
        %p517 = scmp.lt.s32.totalorder %s30, 1
        %s518 = scalar_select %p517, %s30, 1
        %s519 = smul.addr %s518, 8
        %s520 = scalar_lea.vmem %s1, %s519
        %p521 = scmp.lt.s32.totalorder %s30, 1
        %s522 = scalar_select %p521, %s30, 1
        %p523 = scmp.lt.s32.totalorder %s31, 0
        %s524 = scalar_select %p523, %s31, 0
        %s525 = sadd.s32 %s524, %s522
        %s526 = smul.addr %s525, 8
        %s527 = scalar_lea.vmem %s2, %s526
        %p528 = scmp.lt.s32.totalorder %s30, 1
        %s529 = scalar_select %p528, %s30, 1
        %s530 = scalar_lea.vmem %s3, %s529
        %p531 = scmp.lt.s32.totalorder %s32, 3
        %s532 = scalar_select %p531, %s32, 3
        %s533 = smul.addr %s532, 4
        %s534 = smul.addr %s533, 4
        %s535 = scalar_lea.vmem %s4, %s534
        %p536 = scmp.lt.s32.totalorder %s32, 3
        %s537 = scalar_select %p536, %s32, 3
        %s538 = smul.addr %s537, 4
        %s539 = smul.addr %s538, 4
        %s540 = scalar_lea.vmem %s5, %s539
        %p541 = scmp.lt.s32.totalorder %s32, 3
        %s542 = scalar_select %p541, %s32, 3
        %s543 = smul.addr %s542, 4
        %s544 = smul.addr %s543, 4
        %s545 = scalar_lea.vmem %s6, %s544
        %p546 = scmp.lt.s32.totalorder %s32, 3
        %s547 = scalar_select %p546, %s32, 3
        %s548 = smul.addr %s547, 4
        %s549 = scalar_lea.vmem %s7, %s548
        %p551 = scmp.eq.s32.totalorder %s32, 0
        // Predicated region
        $region65: #{tpu_custom_call.1} parent=63 // pred_check
          %p552 = pneg %p551
        $region66: #{tpu_custom_call.1} parent=63 // pred_check_branch
          %554 = sbr.rel (%p552) target = $region68
        $region67: #{tpu_custom_call.1} parent=63 // pred_region
          %vm555 = vcmask 261120
          %556 = vst.msk [vmem:[#allocation2] sm:$0xff] %vm555, 0.0
        $region68: #{tpu_custom_call.1} parent=63 // pred_fallthru
          _
        %v557 = vld [vmem:[%s516] sm:$0xff]
        %v558 = vld [vmem:[%s520] sm:$0xff]
        %v559 = vpack.c.bf16 %v557, %v557
        %v560 = vpack.c.bf16 %v558, %v558
        %v561 = vld [vmem:[%s535] sm:$0xf]
        %v562 = vld [vmem:[%s535 + $0x4] sm:$0xf]
        %v563 = vld [vmem:[%s535 + $0x8] sm:$0xf]
        %v564 = vld [vmem:[%s535 + $0xc] sm:$0xf]
        %v569 = vunpack.c.l.b16 %v561
        %v570 = vunpack.c.l.b16 %v562
        %v571 = vunpack.c.l.b16 %v563
        %v572 = vunpack.c.l.b16 %v564
        %v573 = vpack.c.b16 %v570, %v569
        %v574 = vpack.c.b16 %v572, %v571
        %vm577 = vcmask 261120
        %v579 = vsel %vm577, %v559, 0
        %581 = vmatprep.subr.bf16.mxu0 0
        %582 = vmatpush1.bf16.msra.mxu0 %v573
        %583 = vmatprep.subr.bf16.mxu0 0
        %584 = vmatpush1.bf16.msra.mxu0 %v574
        %585 = vmatprep.subr.bf16.mxu0 0
        %586 = vmatpush1.bf16.msra.mxu0 0
        %587 = vmatprep.subr.bf16.mxu0 0
        %588 = vmatpush1.bf16.msra.mxu0 0
        %589 = vmatprep.subr.bf16.mxu0 0
        %590 = vmatpush1.bf16.msra.mxu0 0
        %591 = vmatprep.subr.bf16.mxu0 0
        %592 = vmatpush1.bf16.msra.mxu0 0
        %593 = vmatprep.subr.bf16.mxu0 0
        %594 = vmatpush1.bf16.msra.mxu0 0
        %595 = vmatprep.subr.bf16.mxu0 0
        %596 = vmatpush1.bf16.msra.mxu0 0
        %597 = vmatprep.subr.bf16.mxu0 0
        %598 = vmatpush1.bf16.msra.mxu0 0
        %599 = vmatprep.subr.bf16.mxu0 0
        %600 = vmatpush1.bf16.msra.mxu0 0
        %601 = vmatprep.subr.bf16.mxu0 0
        %602 = vmatpush1.bf16.msra.mxu0 0
        %603 = vmatprep.subr.bf16.mxu0 0
        %604 = vmatpush1.bf16.msra.mxu0 0
        %605 = vmatprep.subr.bf16.mxu0 0
        %606 = vmatpush1.bf16.msra.mxu0 0
        %607 = vmatprep.subr.bf16.mxu0 0
        %608 = vmatpush1.bf16.msra.mxu0 0
        %609 = vmatprep.subr.bf16.mxu0 0
        %610 = vmatpush1.bf16.msra.mxu0 0
        %611 = vmatprep.subr.bf16.mxu0 0
        %612 = vmatpush1.bf16.msra.mxu0 0
        %613 = vmatprep.mubr.bf16.mxu0 0
        %614 = vmatmul.mubr.bf16.gmra.mrb[0].mxu0 %v579
        %v615 = vpop.f32.mrb[0].mxu0
        %v616 = vadd.f32 0.0, %v615
        %v617 = vpop.f32.mrb[0].mxu0
        %v618 = vpop.f32.mrb[0].mxu0
        %v619 = vpop.f32.mrb[0].mxu0
        %620 = vdwg.mxu0
        %v621 = vld [vmem:[%s540] sm:$0xf]
        %v622 = vld [vmem:[%s540 + $0x4] sm:$0xf]
        %v623 = vld [vmem:[%s540 + $0x8] sm:$0xf]
        %v624 = vld [vmem:[%s540 + $0xc] sm:$0xf]
        %v629 = vunpack.c.l.b16 %v621
        %v630 = vunpack.c.l.b16 %v622
        %v631 = vunpack.c.l.b16 %v623
        %v632 = vunpack.c.l.b16 %v624
        %v633 = vpack.c.b16 %v630, %v629
        %v634 = vpack.c.b16 %v632, %v631
        %v638 = vsel %vm577, %v560, 0
        %640 = vmatprep.subr.bf16.mxu0 0
        %641 = vmatpush1.bf16.msra.mxu0 %v633
        %642 = vmatprep.subr.bf16.mxu0 0
        %643 = vmatpush1.bf16.msra.mxu0 %v634
        %644 = vmatprep.subr.bf16.mxu0 0
        %645 = vmatpush1.bf16.msra.mxu0 0
        %646 = vmatprep.subr.bf16.mxu0 0
        %647 = vmatpush1.bf16.msra.mxu0 0
        %648 = vmatprep.subr.bf16.mxu0 0
        %649 = vmatpush1.bf16.msra.mxu0 0
        %650 = vmatprep.subr.bf16.mxu0 0
        %651 = vmatpush1.bf16.msra.mxu0 0
        %652 = vmatprep.subr.bf16.mxu0 0
        %653 = vmatpush1.bf16.msra.mxu0 0
        %654 = vmatprep.subr.bf16.mxu0 0
        %655 = vmatpush1.bf16.msra.mxu0 0
        %656 = vmatprep.subr.bf16.mxu0 0
        %657 = vmatpush1.bf16.msra.mxu0 0
        %658 = vmatprep.subr.bf16.mxu0 0
        %659 = vmatpush1.bf16.msra.mxu0 0
        %660 = vmatprep.subr.bf16.mxu0 0
        %661 = vmatpush1.bf16.msra.mxu0 0
        %662 = vmatprep.subr.bf16.mxu0 0
        %663 = vmatpush1.bf16.msra.mxu0 0
        %664 = vmatprep.subr.bf16.mxu0 0
        %665 = vmatpush1.bf16.msra.mxu0 0
        %666 = vmatprep.subr.bf16.mxu0 0
        %667 = vmatpush1.bf16.msra.mxu0 0
        %668 = vmatprep.subr.bf16.mxu0 0
        %669 = vmatpush1.bf16.msra.mxu0 0
        %670 = vmatprep.subr.bf16.mxu0 0
        %671 = vmatpush1.bf16.msra.mxu0 0
        %672 = vmatprep.mubr.bf16.mxu0 0
        %673 = vmatmul.mubr.bf16.gmra.mrb[0].mxu0 %v638
        %v674 = vpop.f32.mrb[0].mxu0
        %v675 = vadd.f32 0.0, %v674
        %v676 = vpop.f32.mrb[0].mxu0
        %v677 = vpop.f32.mrb[0].mxu0
        %v678 = vpop.f32.mrb[0].mxu0
        %679 = vdwg.mxu0
        %v680 = vld [vmem:[%s545] sm:$0xf]
        %v681 = vld [vmem:[%s545 + $0x4] sm:$0xf]
        %v682 = vld [vmem:[%s545 + $0x8] sm:$0xf]
        %v683 = vld [vmem:[%s545 + $0xc] sm:$0xf]
        %v688 = vunpack.c.l.b16 %v680
        %v689 = vunpack.c.l.b16 %v681
        %v690 = vunpack.c.l.b16 %v682
        %v691 = vunpack.c.l.b16 %v683
        %v692 = vpack.c.b16 %v689, %v688
        %v693 = vpack.c.b16 %v691, %v690
        %696 = vmatprep.subr.bf16.mxu0 0
        %697 = vmatpush1.bf16.msra.mxu0 %v692
        %698 = vmatprep.subr.bf16.mxu0 0
        %699 = vmatpush1.bf16.msra.mxu0 %v693
        %700 = vmatprep.subr.bf16.mxu0 0
        %701 = vmatpush1.bf16.msra.mxu0 0
        %702 = vmatprep.subr.bf16.mxu0 0
        %703 = vmatpush1.bf16.msra.mxu0 0
        %704 = vmatprep.subr.bf16.mxu0 0
        %705 = vmatpush1.bf16.msra.mxu0 0
        %706 = vmatprep.subr.bf16.mxu0 0
        %707 = vmatpush1.bf16.msra.mxu0 0
        %708 = vmatprep.subr.bf16.mxu0 0
        %709 = vmatpush1.bf16.msra.mxu0 0
        %710 = vmatprep.subr.bf16.mxu0 0
        %711 = vmatpush1.bf16.msra.mxu0 0
        %712 = vmatprep.subr.bf16.mxu0 0
        %713 = vmatpush1.bf16.msra.mxu0 0
        %714 = vmatprep.subr.bf16.mxu0 0
        %715 = vmatpush1.bf16.msra.mxu0 0
        %716 = vmatprep.subr.bf16.mxu0 0
        %717 = vmatpush1.bf16.msra.mxu0 0
        %718 = vmatprep.subr.bf16.mxu0 0
        %719 = vmatpush1.bf16.msra.mxu0 0
        %720 = vmatprep.subr.bf16.mxu0 0
        %721 = vmatpush1.bf16.msra.mxu0 0
        %722 = vmatprep.subr.bf16.mxu0 0
        %723 = vmatpush1.bf16.msra.mxu0 0
        %724 = vmatprep.subr.bf16.mxu0 0
        %725 = vmatpush1.bf16.msra.mxu0 0
        %726 = vmatprep.subr.bf16.mxu0 0
        %727 = vmatpush1.bf16.msra.mxu0 0
        %728 = vmatprep.mubr.bf16.mxu0 0
        %729 = vmatmul.mubr.bf16.gmra.mrb[0].mxu0 %v638
        %v730 = vpop.f32.mrb[0].mxu0
        %v731 = vadd.f32 0.0, %v730
        %v732 = vpop.f32.mrb[0].mxu0
        %v733 = vpop.f32.mrb[0].mxu0
        %v734 = vpop.f32.mrb[0].mxu0
        %735 = vdwg.mxu0
        %v736 = vpack.c.bf16 %v616, %v616
        %v737 = vpack.c.bf16 %v675, %v675
        %vm738 = vcmask 64512
        %v740 = vsel %vm738, %v736, 0
        %v743 = vsel %vm738, %v737, 0
        %745 = vmatprep.subr.bf16.mxu0 0
        %746 = vmatpush1.bf16.xpose.msra.mxu0 %v743
        %747 = vmatprep.subr.bf16.mxu0 0
        %748 = vmatpush1.bf16.xpose.msra.mxu0 0
        %749 = vmatprep.subr.bf16.mxu0 0
        %750 = vmatpush1.bf16.xpose.msra.mxu0 0
        %751 = vmatprep.subr.bf16.mxu0 0
        %752 = vmatpush1.bf16.xpose.msra.mxu0 0
        %753 = vmatprep.subr.bf16.mxu0 0
        %754 = vmatpush1.bf16.xpose.msra.mxu0 0
        %755 = vmatprep.subr.bf16.mxu0 0
        %756 = vmatpush1.bf16.xpose.msra.mxu0 0
        %757 = vmatprep.subr.bf16.mxu0 0
        %758 = vmatpush1.bf16.xpose.msra.mxu0 0
        %759 = vmatprep.subr.bf16.mxu0 0
        %760 = vmatpush1.bf16.xpose.msra.mxu0 0
        %761 = vmatprep.subr.bf16.mxu0 0
        %762 = vmatpush1.bf16.xpose.msra.mxu0 0
        %763 = vmatprep.subr.bf16.mxu0 0
        %764 = vmatpush1.bf16.xpose.msra.mxu0 0
        %765 = vmatprep.subr.bf16.mxu0 0
        %766 = vmatpush1.bf16.xpose.msra.mxu0 0
        %767 = vmatprep.subr.bf16.mxu0 0
        %768 = vmatpush1.bf16.xpose.msra.mxu0 0
        %769 = vmatprep.subr.bf16.mxu0 0
        %770 = vmatpush1.bf16.xpose.msra.mxu0 0
        %771 = vmatprep.subr.bf16.mxu0 0
        %772 = vmatpush1.bf16.xpose.msra.mxu0 0
        %773 = vmatprep.subr.bf16.mxu0 0
        %774 = vmatpush1.bf16.xpose.msra.mxu0 0
        %775 = vmatprep.subr.bf16.mxu0 0
        %776 = vmatpush1.bf16.xpose.msra.mxu0 0
        %777 = vmatprep.mubr.bf16.mxu0 0
        %778 = vmatmul.mubr.bf16.gmra.mrb[0].mxu0 %v740
        %v779 = vpop.f32.mrb[0].mxu0
        %v780 = vadd.f32 0.0, %v779
        %v781 = vpop.f32.mrb[0].mxu0
        %v782 = vpop.f32.mrb[0].mxu0
        %v783 = vpop.f32.mrb[0].mxu0
        %784 = vdwg.mxu0
        %v785 = vld [vmem:[%s527] sm:$0xff]
        %v786 = vld [vmem:[%s530] sm:$0x1]
        %788 = vset.pattern.permute.xlu0 0
        %789 = vperm.xlu0 %788, %v785
        %v790 = vpop.permute.xlu0 %789
        %v793 = vlaneseq
        %v794 = vshrl.u32 %v793, 7
        %v795 = vsub.s32 0, %v794
        %v796 = vrot.slane %v786, %v795
        %v798 = vmul.f32 %v790, %v796
        %v799 = vmul.f32 %v780, %v798
        %vm800 = vcmp.eq.f32.partialorder %v799, 0.0
        %v801 = vsel %vm800, 1e-10, %v799
        %v802 = vsel %vm738, %v801, -inf
        %803 = vmax.xlane.f32.xlu0 %v802
        %v804 = vpop.xlane.xlu0 %803
        %v805 = vsub.f32 %v801, %v804
        %v806 = vmul.f32 %v805, 1.442695
        %v807 = vpow.pop %v806
        %v808 = vsel %vm738, %v807, 0.0
        %809 = vadd.xlane.f32.xlu0 %v808
        %v810 = vpop.xlane.xlu0 %809
        %v811 = vrcp.pop %v810
        %v812 = vmul.f32 %v807, %v811
        %v813 = vpack.c.bf16 %v812, %v812
        %v814 = vpack.c.bf16 %v731, %v731
        %v816 = vsel %vm738, %v813, 0
        %vm818 = vcmask 1043456
        %v820 = vsel %vm818, %v814, 0
        %822 = vmatprep.subr.bf16.mxu0 0
        %823 = vmatpush1.bf16.msra.mxu0 %v820
        %824 = vmatprep.subr.bf16.mxu0 0
        %825 = vmatpush1.bf16.msra.mxu0 0
        %826 = vmatprep.subr.bf16.mxu0 0
        %827 = vmatpush1.bf16.msra.mxu0 0
        %828 = vmatprep.subr.bf16.mxu0 0
        %829 = vmatpush1.bf16.msra.mxu0 0
        %830 = vmatprep.subr.bf16.mxu0 0
        %831 = vmatpush1.bf16.msra.mxu0 0
        %832 = vmatprep.subr.bf16.mxu0 0
        %833 = vmatpush1.bf16.msra.mxu0 0
        %834 = vmatprep.subr.bf16.mxu0 0
        %835 = vmatpush1.bf16.msra.mxu0 0
        %836 = vmatprep.subr.bf16.mxu0 0
        %837 = vmatpush1.bf16.msra.mxu0 0
        %838 = vmatprep.subr.bf16.mxu0 0
        %839 = vmatpush1.bf16.msra.mxu0 0
        %840 = vmatprep.subr.bf16.mxu0 0
        %841 = vmatpush1.bf16.msra.mxu0 0
        %842 = vmatprep.subr.bf16.mxu0 0
        %843 = vmatpush1.bf16.msra.mxu0 0
        %844 = vmatprep.subr.bf16.mxu0 0
        %845 = vmatpush1.bf16.msra.mxu0 0
        %846 = vmatprep.subr.bf16.mxu0 0
        %847 = vmatpush1.bf16.msra.mxu0 0
        %848 = vmatprep.subr.bf16.mxu0 0
        %849 = vmatpush1.bf16.msra.mxu0 0
        %850 = vmatprep.subr.bf16.mxu0 0
        %851 = vmatpush1.bf16.msra.mxu0 0
        %852 = vmatprep.subr.bf16.mxu0 0
        %853 = vmatpush1.bf16.msra.mxu0 0
        %854 = vmatprep.mubr.bf16.mxu0 0
        %855 = vmatmul.mubr.bf16.gmra.mrb[0].mxu0 %v816
        %v856 = vpop.f32.mrb[0].mxu0
        %v857 = vadd.f32 0.0, %v856
        %v858 = vpop.f32.mrb[0].mxu0
        %v859 = vpop.f32.mrb[0].mxu0
        %v860 = vpop.f32.mrb[0].mxu0
        %861 = vdwg.mxu0
        %v862 = vld [vmem:[#allocation2] sm:$0xff]
        %v863 = vpack.c.bf16 %v857, %v857
        %v864 = vld [vmem:[%s549] sm:$0xf]
        %v866 = vsel %vm738, %v863, 0
        %v869 = vsel %vm818, %v864, 0
        %871 = vmatprep.subr.bf16.mxu0 0
        %872 = vmatpush1.bf16.msra.mxu0 %v869
        %873 = vmatprep.subr.bf16.mxu0 0
        %874 = vmatpush1.bf16.msra.mxu0 0
        %875 = vmatprep.subr.bf16.mxu0 0
        %876 = vmatpush1.bf16.msra.mxu0 0
        %877 = vmatprep.subr.bf16.mxu0 0
        %878 = vmatpush1.bf16.msra.mxu0 0
        %879 = vmatprep.subr.bf16.mxu0 0
        %880 = vmatpush1.bf16.msra.mxu0 0
        %881 = vmatprep.subr.bf16.mxu0 0
        %882 = vmatpush1.bf16.msra.mxu0 0
        %883 = vmatprep.subr.bf16.mxu0 0
        %884 = vmatpush1.bf16.msra.mxu0 0
        %885 = vmatprep.subr.bf16.mxu0 0
        %886 = vmatpush1.bf16.msra.mxu0 0
        %887 = vmatprep.subr.bf16.mxu0 0
        %888 = vmatpush1.bf16.msra.mxu0 0
        %889 = vmatprep.subr.bf16.mxu0 0
        %890 = vmatpush1.bf16.msra.mxu0 0
        %891 = vmatprep.subr.bf16.mxu0 0
        %892 = vmatpush1.bf16.msra.mxu0 0
        %893 = vmatprep.subr.bf16.mxu0 0
        %894 = vmatpush1.bf16.msra.mxu0 0
        %895 = vmatprep.subr.bf16.mxu0 0
        %896 = vmatpush1.bf16.msra.mxu0 0
        %897 = vmatprep.subr.bf16.mxu0 0
        %898 = vmatpush1.bf16.msra.mxu0 0
        %899 = vmatprep.subr.bf16.mxu0 0
        %900 = vmatpush1.bf16.msra.mxu0 0
        %901 = vmatprep.subr.bf16.mxu0 0
        %902 = vmatpush1.bf16.msra.mxu0 0
        %903 = vmatprep.mubr.bf16.mxu0 0
        %904 = vmatmul.mubr.bf16.gmra.mrb[0].mxu0 %v866
        %v905 = vpop.f32.mrb[0].mxu0
        %v906 = vadd.f32 0.0, %v905
        %v907 = vpop.f32.mrb[0].mxu0
        %v908 = vpop.f32.mrb[0].mxu0
        %v909 = vpop.f32.mrb[0].mxu0
        %910 = vdwg.mxu0
        %v911 = vadd.f32 %v862, %v906
        %912 = vst.msk [vmem:[#allocation2] sm:$0xff] %vm577, %v911
        %p913 = scmp.eq.s32.totalorder %s32, 3
        // Predicated region
        $region69: #{tpu_custom_call.1} parent=63 // pred_check
          %p914 = pneg %p913
        $region70: #{tpu_custom_call.1} parent=63 // pred_check_branch
          %916 = sbr.rel (%p914) target = $region72
        $region71: #{tpu_custom_call.1} parent=63 // pred_region
          %v917 = vld [vmem:[#allocation2] sm:$0xff]
          %v918 = vadd.f32 %v557, %v917
          %v919 = vld [vmem:[%s8] sm:$0x1]
          %v921 = vlaneseq
          %v922 = vshrl.u32 %v921, 7
          %v923 = vsub.s32 0, %v922
          %v924 = vrot.slane %v919, %v923
          %v926 = vadd.f32 %v918, %v924
          %v927 = vsel %vm577, %v926, 0.0
          %928 = vadd.xlane.f32.xlu0 %v927
          %v929 = vpop.xlane.xlu0 %928
          %v930 = vrcp.pop 32.0
          %v931 = vmul.f32 %v929, %v930
          %v932 = vsub.f32 %v926, %v931
          %v933 = vmul.f32 %v932, %v932
          %v934 = vsel %vm577, %v933, 0.0
          %935 = vadd.xlane.f32.xlu0 %v934
          %v936 = vpop.xlane.xlu0 %935
          %v937 = vmul.f32 %v936, %v930
          %v938 = vadd.f32 %v937, 1e-06
          %v939 = vrsqrt.pop %v938
          %v940 = vmul.f32 %v932, %v939
          %v941 = vld [vmem:[%s9] sm:$0x1]
          %v943 = vlaneseq
          %v944 = vshrl.u32 %v943, 7
          %v945 = vsub.s32 0, %v944
          %v946 = vrot.slane %v941, %v945
          %v948 = vmul.f32 %v940, %v946
          %v949 = vld [vmem:[%s10] sm:$0x1]
          %v951 = vlaneseq
          %v952 = vshrl.u32 %v951, 7
          %v953 = vsub.s32 0, %v952
          %v954 = vrot.slane %v949, %v953
          %v956 = vadd.f32 %v948, %v954
          %957 = vst.msk [vmem:[%s509] sm:$0xff] %vm577, %v956
        $region72: #{tpu_custom_call.1} parent=63 // pred_fallthru
          _
        %s958 = sand.u32 %s329, 1
        %s959 = scalar_lea.sflag [#allocation4], %s958
        %s960 = sand.u32 %s329, 1
        %s961 = smul.addr %s960, 8
        %s962 = scalar_lea.vmem [#allocation3], %s961
        // Predicated region
        $region73: #{tpu_custom_call.1} parent=63 // pred_check
          %p963 = pneg %p339
        $region74: #{tpu_custom_call.1} parent=63 // pred_check_branch
          %965 = sbr.rel (%p963) target = $region76
        $region75: #{tpu_custom_call.1} parent=63 // pred_region
          %s967 = ssub.s32 128, 128
          %968 = vsyncadd %s959, %s967
          %s969 = sadd.s32 %s31, %s30
          %s970 = smul.addr %s969, 128
          %s971 = scalar_lea.hbm %s11, %s970
          %s973 = sshll.u32 %s962, 4
          %s974 = int_to_ptr.vmem [resolvable:$true] %s973
          %976 = dma.vmem_to_hbm [thread:$0]  %s974, 128, %s971, %s959
        $region76: #{tpu_custom_call.1} parent=63 // pred_fallthru
          _
      $region64: #{tpu_custom_call.1} parent=5 // pred_fallthru
        _
      %p977 = scmp.le.s32.totalorder 2, %s20
      // Predicated region
      $region77: #{tpu_custom_call.1} parent=5 // pred_check
        %p978 = pneg %p977
      $region78: #{tpu_custom_call.1} parent=5 // pred_check_branch
        %980 = sbr.rel (%p978) target = $region80
      $region79: #{tpu_custom_call.1} parent=5 // pred_region
        %s981 = ssub.s32 %s20, 2
        // Predicated region
        $region81: #{tpu_custom_call.1} parent=79 // pred_check
          %p982 = pneg %p345
        $region82: #{tpu_custom_call.1} parent=79 // pred_check_branch
          %984 = sbr.rel (%p982) target = $region84
        $region83: #{tpu_custom_call.1} parent=79 // pred_region
          %s985 = sand.u32 %s330, 1
          %s986 = scalar_lea.sflag [#allocation4], %s985
          %s987 = sand.u32 %s330, 1
          %s988 = smul.addr %s987, 8
          %s989 = scalar_lea.vmem [#allocation3], %s988
          %990 = dma.done %s986, 128
        $region84: #{tpu_custom_call.1} parent=79 // pred_fallthru
          _
      $region80: #{tpu_custom_call.1} parent=5 // pred_fallthru
        _
    $region6: #{tpu_custom_call.1} parent=1 // loop_footer
      %s24 = sadd.s32 1, %s20
    $region7: #{tpu_custom_call.1} parent=1 // loop_footer_branch
      %19 = sbr.rel target = $region3
    $region8: #{tpu_custom_call.1} parent=1 // loop_exit
      _
    %991 = vsyncpa [#allocation4], 1
    %s992 = scalar_lea.sflag [#allocation4], 1
    %993 = vsyncpa %s992, 1

</llo_original>
